<compile_context>
chip_gen: v5e
topology: v5e:2x2
jax: 0.10.0
libtpu: 0.0.40
codegen_flags: <defaults>
</compile_context>

<pallas_src>
import functools

import jax
import jax.numpy as jnp
from jax import lax
from jax.experimental import pallas as pl
from jax.experimental.pallas import tpu as pltpu


# --------------------------------------------------------------------------- #
# helpers
# --------------------------------------------------------------------------- #
def _repeat2(a, axis):
    """Nearest-neighbour 2x repeat along `axis` (expand -> broadcast -> merge).

    Written as broadcast_to + reshape so it lowers cleanly inside Mosaic."""
    a = jnp.expand_dims(a, axis + 1)
    a = jnp.broadcast_to(a, a.shape[:axis + 1] + (2,) + a.shape[axis + 2:])
    return a.reshape(a.shape[:axis] + (2 * a.shape[axis],) + a.shape[axis + 2:])


def _vmem_limit_bytes():
    """Generation-aware scoped-VMEM limit (v5e/v6e: 128 MiB phys, v7x: 64 MiB)."""
    phys = 64 * 1024 * 1024                     # conservative (v7x-sized) default
    try:
        phys = pltpu.get_tpu_info().vmem_capacity_bytes
    except Exception:                           # older jaxlib / interpret mode
        pass
    return max(32 * 1024 * 1024, min(100 * 1024 * 1024, int(phys * 0.6)))


def _pick_tile_h(h_out, w_out, cin, cout, hp, wp, upsample, budget):
    """Largest H-tile whose *real* pass-1 working set fits `budget` bytes.

    Working set = double-buffered resident padded sample + double-buffered bf16
    conv output tile + in-kernel strip / tap / f32-accumulator temporaries."""
    resident = 2 * hp * wp * cin * 2            # bf16 sample, 2 pipeline buffers
    weights = 2 * 9 * cin * cout * 2

    def working_set(th):
        strip = (th + 4) * ((2 * wp) if upsample else wp) * cin * 2
        taps = 2 * th * w_out * cin * 2
        acc = 3 * th * w_out * cout * 4         # acc + transposed copy + slack
        conv_out = 2 * th * w_out * cout * 2
        return resident + weights + conv_out + int(1.5 * (strip + taps + acc))

    cands = [t for t in range(8, h_out + 1, 8)
             if h_out % t == 0 and (t == h_out or (t * w_out) % 128 == 0)]
    if not cands:
        return h_out                            # full-extent block is always legal
    fitting = [t for t in cands if working_set(t) <= budget]
    if fitting:
        return max(fitting)                     # biggest tile -> fewest grid steps
    # TODO(synk): halo-tile the input along H (manual 1-row-halo DMA) instead of
    # keeping the whole padded sample resident once shapes outgrow VMEM (v7x).
    return min(cands)


# --------------------------------------------------------------------------- #
# Pass 1: conv3x3 tile (+ fused nearest-2x upsample) + per-tile BN partials
# --------------------------------------------------------------------------- #
def _conv_stats_kernel(x_ref, w_ref, conv_ref, stats_ref, *, th, w_out, upsample):
    """x_ref:     (Hs+2, Ws+2, Cin) bf16  padded ORIGINAL-resolution sample (resident)
       w_ref:     (9, Cin, Cout)    bf16  one (Cin, Cout) matrix per conv tap
       conv_ref:  (Cout, TH*W_out)  bf16  conv tile in N,C,(H*W) layout (lane-dense)
       stats_ref: (2, Cout)         f32   [sum, tile-mean-centred sum of squares]
    """
    j = pl.program_id(1)
    cin = x_ref.shape[-1]
    cout = conv_ref.shape[0]

    if upsample:
        # Fused nearest-2x upsample: replicate rows/cols of the resident small
        # sample in VMEM instead of materializing a 4x larger array in HBM.
        rows = th // 2 + 2
        start = pl.multiple_of(j * (th // 2), th // 2)
        small = x_ref[pl.ds(start, rows), :, :]          # (th/2+2, Ws+2, Cin)
        big = _repeat2(_repeat2(small, 0), 1)            # (th+4, 2*Ws+4, Cin)
        strip = big[1:th + 3, 1:w_out + 3, :]            # (th+2, W_out+2, Cin)
    else:
        start = pl.multiple_of(j * th, th)
        strip = x_ref[pl.ds(start, th + 2), :, :]        # (th+2, W_out+2, Cin)

    # 9 accumulating K=Cin MXU dots (no im2col concat / big relayout).
    acc = jnp.zeros((th * w_out, cout), jnp.float32)
    for kh in range(3):
        rows3 = strip[kh:kh + th]                        # leading-dim slice: free
        for kw in range(3):
            tap = rows3[:, kw:kw + w_out, :].reshape(th * w_out, cin)
            acc += jnp.dot(tap, w_ref[3 * kh + kw],
                           preferred_element_type=jnp.float32)

    # Per-tile BN partials centred at the tile mean (avoids E[x^2]-E[x]^2
    # cancellation; merged across tiles with the parallel-variance formula).
    cnt = th * w_out
    s1 = jnp.sum(acc, axis=0, keepdims=True)             # (1, Cout)
    centred = acc - s1 / cnt
    m2 = jnp.sum(centred * centred, axis=0, keepdims=True)
    stats_ref[...] = jnp.concatenate([s1, m2], axis=0)

    # One 2-D transpose per tile gives the N,C,(H*W) layout: lane-dense bf16
    # stores now, NCHW output later for free (no wrapper-side XLA transpose).
    conv_ref[...] = acc.T.astype(conv_ref.dtype)


# --------------------------------------------------------------------------- #
# Pass 2: lane-dense BN apply + LeakyReLU, output already in N,C,(H*W) layout
# --------------------------------------------------------------------------- #
def _bn_lrelu_kernel(conv_ref, scale_ref, shift_ref, o_ref, *, negative_slope):
    """conv_ref: (Cout, TH*W_out) bf16; scale/shift: (Cout, 1) f32; o_ref: f32."""
    y = conv_ref[...].astype(jnp.float32) * scale_ref[...] + shift_ref[...]
    o_ref[...] = jnp.where(y >= 0, y, negative_slope * y)


# --------------------------------------------------------------------------- #
# Wrapper
# --------------------------------------------------------------------------- #
def conv_norm_relu(x_nchw, w_oihw, b, gamma, beta, *, padding=1,
                   use_upsample=False, eps=1e-5, negative_slope=0.05):
    """Forward of the PyTorch ConvNormRelu module (kernel 3x3, stride 1).

    x_nchw: (N, Cin, H, W) f32; w_oihw: (Cout, Cin, 3, 3); b/gamma/beta: (Cout,).
    Returns NCHW f32, spatial doubled when use_upsample.

    `b` (conv bias) is accepted for interface parity but unused: under
    training-mode BatchNorm the batch-mean subtraction cancels it exactly.
    # TODO(synk): eval-mode BatchNorm (running stats, where the bias matters)
    # is not implemented; this matches the training-mode forward only.
    """
    cout, cin, kh_, kw_ = w_oihw.shape
    assert (kh_, kw_) == (3, 3) and padding == 1, "only k=3, s=1, p=1 implemented"

    n, _, h_in, w_in = x_nchw.shape
    sp = 2 if use_upsample else 1
    h_out, w_out = h_in * sp, w_in * sp
    hw = h_out * w_out

    # ---- prologue: bf16 cast + NCHW->NHWC + zero halo border (one fused XLA chain)
    # TODO(synk): accept NHWC input / use allow_input_fusion to drop the remaining
    # full-array HBM round trip of this prologue.
    xp = jnp.pad(jnp.transpose(x_nchw.astype(jnp.bfloat16), (0, 2, 3, 1)),
                 ((0, 0), (1, 1), (1, 1), (0, 0)))
    hp, wp = h_in + 2, w_in + 2                 # original-resolution padded sample

    # Conv taps as 9 separate (Cin, Cout) matrices, bf16 for the MXU.
    wtap = jnp.transpose(w_oihw, (2, 3, 1, 0)).reshape(9, cin, cout)
    wtap = wtap.astype(jnp.bfloat16)

    vmem_limit = _vmem_limit_bytes()
    th = _pick_tile_h(h_out, w_out, cin, cout, hp, wp, use_upsample,
                      budget=int(vmem_limit * 0.75))
    n_h = h_out // th
    tw = th * w_out

    # Pass-1: split megacore work on N (H axis "arbitrary") so the two v7x TCs do
    # not each re-DMA the same resident sample.
    cparams1 = pltpu.CompilerParams(
        dimension_semantics=("parallel", "arbitrary"),
        vmem_limit_bytes=vmem_limit)
    cparams2 = pltpu.CompilerParams(
        dimension_semantics=("parallel", "parallel"),
        vmem_limit_bytes=vmem_limit)

    # ---- pass 1: conv (+ fused upsample) + per-tile BN partial stats -------------
    conv_flat, stats = pl.pallas_call(
        functools.partial(_conv_stats_kernel, th=th, w_out=w_out,
                          upsample=use_upsample),
        grid=(n, n_h),
        in_specs=[
            # whole padded (original-resolution) sample resident per n
            pl.BlockSpec((None, hp, wp, cin), lambda i, j: (i, 0, 0, 0)),
            pl.BlockSpec((9, cin, cout), lambda i, j: (0, 0, 0)),
        ],
        out_specs=(
            pl.BlockSpec((None, cout, tw), lambda i, j: (i, 0, j)),
            pl.BlockSpec((None, None, 2, cout), lambda i, j: (i, j, 0, 0)),
        ),
        out_shape=(
            jax.ShapeDtypeStruct((n, cout, hw), jnp.bfloat16),   # bf16 intermediate
            jax.ShapeDtypeStruct((n, n_h, 2, cout), jnp.float32),
        ),
        compiler_params=cparams1,
    )(xp, wtap)

    # ---- tiny glue: merge per-tile partials (parallel-variance), fold BN ---------
    cnt_tile = float(tw)
    total = float(n * hw)
    s1 = stats[:, :, 0, :]                       # (N, n_h, Cout)
    m2 = stats[:, :, 1, :]
    mean = jnp.sum(s1, axis=(0, 1)) / total
    tmean = s1 / cnt_tile
    var = (jnp.sum(m2, axis=(0, 1))
           + cnt_tile * jnp.sum((tmean - mean) ** 2, axis=(0, 1))) / total
    var = jnp.maximum(var, 0.0)
    scale = gamma.astype(jnp.float32) * lax.rsqrt(var + eps)
    shift = beta.astype(jnp.float32) - mean * scale
    scale_col = scale.reshape(cout, 1)
    shift_col = shift.reshape(cout, 1)

    # ---- pass 2: lane-dense normalize + LeakyReLU, output already "NCHW-flat" ----
    out_flat = pl.pallas_call(
        functools.partial(_bn_lrelu_kernel, negative_slope=negative_slope),
        grid=(n, n_h),
        in_specs=[
            pl.BlockSpec((None, cout, tw), lambda i, j: (i, 0, j)),
            pl.BlockSpec((cout, 1), lambda i, j: (0, 0)),
            pl.BlockSpec((cout, 1), lambda i, j: (0, 0)),
        ],
        out_specs=pl.BlockSpec((None, cout, tw), lambda i, j: (i, 0, j)),
        out_shape=jax.ShapeDtypeStruct((n, cout, hw), jnp.float32),
        compiler_params=cparams2,
    )(conv_flat, scale_col, shift_col)

    # Free, contiguous metadata reshape (no transpose, no copy).
    return out_flat.reshape(n, cout, h_out, w_out)


# --------------------------------------------------------------------------- #
# Pure-JAX reference (training-mode BatchNorm forward)
# --------------------------------------------------------------------------- #
def _reference(x_nchw, w_oihw, b, gamma, beta, *, use_upsample=False,
               eps=1e-5, negative_slope=0.05):
    x = x_nchw
    if use_upsample:
        x = jnp.repeat(jnp.repeat(x, 2, axis=2), 2, axis=3)
    y = lax.conv_general_dilated(
        x, w_oihw, window_strides=(1, 1), padding=[(1, 1), (1, 1)],
        dimension_numbers=("NCHW", "OIHW", "NCHW"),
        precision=lax.Precision.HIGHEST)
    y = y + b[None, :, None, None]
    mean = jnp.mean(y, axis=(0, 2, 3), keepdims=True)
    var = jnp.mean((y - mean) ** 2, axis=(0, 2, 3), keepdims=True)
    y = (y - mean) * lax.rsqrt(var + eps)
    y = y * gamma[None, :, None, None] + beta[None, :, None, None]
    return jnp.where(y >= 0, y, negative_slope * y)


if __name__ == "__main__":
    key = jax.random.PRNGKey(0)
    k_x, k_w, k_b = jax.random.split(key, 3)

    N, Cin, H, W = 2, 4, 16, 16
    Cout = 8

    x = jax.random.normal(k_x, (N, Cin, H, W), dtype=jnp.float32)
    fan_in = Cin * 3 * 3
    w = jax.random.normal(k_w, (Cout, Cin, 3, 3), dtype=jnp.float32) / jnp.sqrt(fan_in)
    b = jax.random.normal(k_b, (Cout,), dtype=jnp.float32) * 0.1
    gamma = jnp.ones((Cout,), jnp.float32)   # BatchNorm2d default weight
    beta = jnp.zeros((Cout,), jnp.float32)   # BatchNorm2d default bias

    fwd = jax.jit(conv_norm_relu,
                  static_argnames=("padding", "use_upsample", "eps", "negative_slope"))

    # bf16 inputs/weights + bf16 intermediate vs HIGHEST-precision f32 reference:
    # 3e-2 tolerance (documented, matches review note).
    out = jax.block_until_ready(fwd(x, w, b, gamma, beta))
    ref = _reference(x, w, b, gamma, beta)
    assert out.shape == (N, Cout, H, W), out.shape
    assert jnp.allclose(out, ref, atol=3e-2, rtol=3e-2), \
        float(jnp.max(jnp.abs(out - ref)))

    out_up = jax.block_until_ready(fwd(x, w, b, gamma, beta, use_upsample=True))
    ref_up = _reference(x, w, b, gamma, beta, use_upsample=True)
    assert out_up.shape == (N, Cout, 2 * H, 2 * W), out_up.shape
    assert jnp.allclose(out_up, ref_up, atol=3e-2, rtol=3e-2), \
        float(jnp.max(jnp.abs(out_up - ref_up)))

    print("KERNEL_OK")
</pallas_src>

<mosaic_0001>
module attributes {stable_mosaic.version = 11 : i64} {
  func.func @_conv_stats_kernel(%arg0: i32, %arg1: i32, %arg2: memref<1x18x18x4xbf16, #tpu.memory_space<vmem>>, %arg3: memref<9x4x8xbf16, #tpu.memory_space<vmem>>, %arg4: memref<1x8x256xbf16, #tpu.memory_space<vmem>>, %arg5: memref<1x1x2x8xf32, #tpu.memory_space<vmem>>) attributes {dimension_semantics = [#tpu.dimension_semantics<parallel>, #tpu.dimension_semantics<arbitrary>], iteration_bounds = array<i64: 2, 1>, scalar_prefetch = 0 : i64, scratch_operands = 0 : i64, tpu.core_type = #tpu.core_type<tc>, window_params = [{transform_indices = @transform_0, window_bounds = array<i64: 1, 18, 18, 4>}, {pipeline_mode = #tpu.pipeline_mode<synchronous>, transform_indices = @transform_1, window_bounds = array<i64: 9, 4, 8>}, {transform_indices = @transform_2, window_bounds = array<i64: 1, 8, 256>}, {transform_indices = @transform_3, window_bounds = array<i64: 1, 1, 2, 8>}]} {
    %c16_i32 = arith.constant 16 : i32
    %0 = arith.muli %arg1, %c16_i32 : i32
    %1 = tpu.assume_multiple %0, 16 : i32
    %c0 = arith.constant 0 : index
    %2 = arith.index_cast %1 : i32 to index
    %c0_0 = arith.constant 0 : index
    %c0_1 = arith.constant 0 : index
    %3 = vector.load %arg2[%c0, %2, %c0_0, %c0_1] : memref<1x18x18x4xbf16, #tpu.memory_space<vmem>>, vector<1x18x18x4xbf16>
    %4 = vector.shape_cast %3 : vector<1x18x18x4xbf16> to vector<18x18x4xbf16>
    %cst = arith.constant 0.000000e+00 : f32
    %5 = vector.broadcast %cst : f32 to vector<256x8xf32>
    %6 = vector.extract_strided_slice %4 {offsets = [0, 0, 0], sizes = [16, 18, 4], strides = [1, 1, 1]} : vector<18x18x4xbf16> to vector<16x18x4xbf16>
    %7 = vector.extract_strided_slice %6 {offsets = [0, 0, 0], sizes = [16, 16, 4], strides = [1, 1, 1]} : vector<16x18x4xbf16> to vector<16x16x4xbf16>
    %8 = vector.shape_cast %7 : vector<16x16x4xbf16> to vector<256x4xbf16>
    %c0_2 = arith.constant 0 : index
    %c0_3 = arith.constant 0 : index
    %c0_4 = arith.constant 0 : index
    %9 = vector.load %arg3[%c0_2, %c0_3, %c0_4] : memref<9x4x8xbf16, #tpu.memory_space<vmem>>, vector<1x4x8xbf16>
    %10 = vector.shape_cast %9 : vector<1x4x8xbf16> to vector<4x8xbf16>
    %cst_5 = arith.constant dense<0.000000e+00> : vector<256x8xf32>
    %11 = tpu.matmul %8, %10, %cst_5 {dimension_numbers = #tpu.dot_dimension_numbers<[1], [0], [0], [1], [0, 0, 1, 1], [], []>} : vector<256x4xbf16>, vector<4x8xbf16>, vector<256x8xf32> -> vector<256x8xf32>
    %12 = arith.addf %5, %11 : vector<256x8xf32>
    %13 = vector.extract_strided_slice %6 {offsets = [0, 1, 0], sizes = [16, 16, 4], strides = [1, 1, 1]} : vector<16x18x4xbf16> to vector<16x16x4xbf16>
    %14 = vector.shape_cast %13 : vector<16x16x4xbf16> to vector<256x4xbf16>
    %c1 = arith.constant 1 : index
    %c0_6 = arith.constant 0 : index
    %c0_7 = arith.constant 0 : index
    %15 = vector.load %arg3[%c1, %c0_6, %c0_7] : memref<9x4x8xbf16, #tpu.memory_space<vmem>>, vector<1x4x8xbf16>
    %16 = vector.shape_cast %15 : vector<1x4x8xbf16> to vector<4x8xbf16>
    %cst_8 = arith.constant dense<0.000000e+00> : vector<256x8xf32>
    %17 = tpu.matmul %14, %16, %cst_8 {dimension_numbers = #tpu.dot_dimension_numbers<[1], [0], [0], [1], [0, 0, 1, 1], [], []>} : vector<256x4xbf16>, vector<4x8xbf16>, vector<256x8xf32> -> vector<256x8xf32>
    %18 = arith.addf %12, %17 : vector<256x8xf32>
    %19 = vector.extract_strided_slice %6 {offsets = [0, 2, 0], sizes = [16, 16, 4], strides = [1, 1, 1]} : vector<16x18x4xbf16> to vector<16x16x4xbf16>
    %20 = vector.shape_cast %19 : vector<16x16x4xbf16> to vector<256x4xbf16>
    %c2 = arith.constant 2 : index
    %c0_9 = arith.constant 0 : index
    %c0_10 = arith.constant 0 : index
    %21 = vector.load %arg3[%c2, %c0_9, %c0_10] : memref<9x4x8xbf16, #tpu.memory_space<vmem>>, vector<1x4x8xbf16>
    %22 = vector.shape_cast %21 : vector<1x4x8xbf16> to vector<4x8xbf16>
    %cst_11 = arith.constant dense<0.000000e+00> : vector<256x8xf32>
    %23 = tpu.matmul %20, %22, %cst_11 {dimension_numbers = #tpu.dot_dimension_numbers<[1], [0], [0], [1], [0, 0, 1, 1], [], []>} : vector<256x4xbf16>, vector<4x8xbf16>, vector<256x8xf32> -> vector<256x8xf32>
    %24 = arith.addf %18, %23 : vector<256x8xf32>
    %25 = vector.extract_strided_slice %4 {offsets = [1, 0, 0], sizes = [16, 18, 4], strides = [1, 1, 1]} : vector<18x18x4xbf16> to vector<16x18x4xbf16>
    %26 = vector.extract_strided_slice %25 {offsets = [0, 0, 0], sizes = [16, 16, 4], strides = [1, 1, 1]} : vector<16x18x4xbf16> to vector<16x16x4xbf16>
    %27 = vector.shape_cast %26 : vector<16x16x4xbf16> to vector<256x4xbf16>
    %c3 = arith.constant 3 : index
    %c0_12 = arith.constant 0 : index
    %c0_13 = arith.constant 0 : index
    %28 = vector.load %arg3[%c3, %c0_12, %c0_13] : memref<9x4x8xbf16, #tpu.memory_space<vmem>>, vector<1x4x8xbf16>
    %29 = vector.shape_cast %28 : vector<1x4x8xbf16> to vector<4x8xbf16>
    %cst_14 = arith.constant dense<0.000000e+00> : vector<256x8xf32>
    %30 = tpu.matmul %27, %29, %cst_14 {dimension_numbers = #tpu.dot_dimension_numbers<[1], [0], [0], [1], [0, 0, 1, 1], [], []>} : vector<256x4xbf16>, vector<4x8xbf16>, vector<256x8xf32> -> vector<256x8xf32>
    %31 = arith.addf %24, %30 : vector<256x8xf32>
    %32 = vector.extract_strided_slice %25 {offsets = [0, 1, 0], sizes = [16, 16, 4], strides = [1, 1, 1]} : vector<16x18x4xbf16> to vector<16x16x4xbf16>
    %33 = vector.shape_cast %32 : vector<16x16x4xbf16> to vector<256x4xbf16>
    %c4 = arith.constant 4 : index
    %c0_15 = arith.constant 0 : index
    %c0_16 = arith.constant 0 : index
    %34 = vector.load %arg3[%c4, %c0_15, %c0_16] : memref<9x4x8xbf16, #tpu.memory_space<vmem>>, vector<1x4x8xbf16>
    %35 = vector.shape_cast %34 : vector<1x4x8xbf16> to vector<4x8xbf16>
    %cst_17 = arith.constant dense<0.000000e+00> : vector<256x8xf32>
    %36 = tpu.matmul %33, %35, %cst_17 {dimension_numbers = #tpu.dot_dimension_numbers<[1], [0], [0], [1], [0, 0, 1, 1], [], []>} : vector<256x4xbf16>, vector<4x8xbf16>, vector<256x8xf32> -> vector<256x8xf32>
    %37 = arith.addf %31, %36 : vector<256x8xf32>
    %38 = vector.extract_strided_slice %25 {offsets = [0, 2, 0], sizes = [16, 16, 4], strides = [1, 1, 1]} : vector<16x18x4xbf16> to vector<16x16x4xbf16>
    %39 = vector.shape_cast %38 : vector<16x16x4xbf16> to vector<256x4xbf16>
    %c5 = arith.constant 5 : index
    %c0_18 = arith.constant 0 : index
    %c0_19 = arith.constant 0 : index
    %40 = vector.load %arg3[%c5, %c0_18, %c0_19] : memref<9x4x8xbf16, #tpu.memory_space<vmem>>, vector<1x4x8xbf16>
    %41 = vector.shape_cast %40 : vector<1x4x8xbf16> to vector<4x8xbf16>
    %cst_20 = arith.constant dense<0.000000e+00> : vector<256x8xf32>
    %42 = tpu.matmul %39, %41, %cst_20 {dimension_numbers = #tpu.dot_dimension_numbers<[1], [0], [0], [1], [0, 0, 1, 1], [], []>} : vector<256x4xbf16>, vector<4x8xbf16>, vector<256x8xf32> -> vector<256x8xf32>
    %43 = arith.addf %37, %42 : vector<256x8xf32>
    %44 = vector.extract_strided_slice %4 {offsets = [2, 0, 0], sizes = [16, 18, 4], strides = [1, 1, 1]} : vector<18x18x4xbf16> to vector<16x18x4xbf16>
    %45 = vector.extract_strided_slice %44 {offsets = [0, 0, 0], sizes = [16, 16, 4], strides = [1, 1, 1]} : vector<16x18x4xbf16> to vector<16x16x4xbf16>
    %46 = vector.shape_cast %45 : vector<16x16x4xbf16> to vector<256x4xbf16>
    %c6 = arith.constant 6 : index
    %c0_21 = arith.constant 0 : index
    %c0_22 = arith.constant 0 : index
    %47 = vector.load %arg3[%c6, %c0_21, %c0_22] : memref<9x4x8xbf16, #tpu.memory_space<vmem>>, vector<1x4x8xbf16>
    %48 = vector.shape_cast %47 : vector<1x4x8xbf16> to vector<4x8xbf16>
    %cst_23 = arith.constant dense<0.000000e+00> : vector<256x8xf32>
    %49 = tpu.matmul %46, %48, %cst_23 {dimension_numbers = #tpu.dot_dimension_numbers<[1], [0], [0], [1], [0, 0, 1, 1], [], []>} : vector<256x4xbf16>, vector<4x8xbf16>, vector<256x8xf32> -> vector<256x8xf32>
    %50 = arith.addf %43, %49 : vector<256x8xf32>
    %51 = vector.extract_strided_slice %44 {offsets = [0, 1, 0], sizes = [16, 16, 4], strides = [1, 1, 1]} : vector<16x18x4xbf16> to vector<16x16x4xbf16>
    %52 = vector.shape_cast %51 : vector<16x16x4xbf16> to vector<256x4xbf16>
    %c7 = arith.constant 7 : index
    %c0_24 = arith.constant 0 : index
    %c0_25 = arith.constant 0 : index
    %53 = vector.load %arg3[%c7, %c0_24, %c0_25] : memref<9x4x8xbf16, #tpu.memory_space<vmem>>, vector<1x4x8xbf16>
    %54 = vector.shape_cast %53 : vector<1x4x8xbf16> to vector<4x8xbf16>
    %cst_26 = arith.constant dense<0.000000e+00> : vector<256x8xf32>
    %55 = tpu.matmul %52, %54, %cst_26 {dimension_numbers = #tpu.dot_dimension_numbers<[1], [0], [0], [1], [0, 0, 1, 1], [], []>} : vector<256x4xbf16>, vector<4x8xbf16>, vector<256x8xf32> -> vector<256x8xf32>
    %56 = arith.addf %50, %55 : vector<256x8xf32>
    %57 = vector.extract_strided_slice %44 {offsets = [0, 2, 0], sizes = [16, 16, 4], strides = [1, 1, 1]} : vector<16x18x4xbf16> to vector<16x16x4xbf16>
    %58 = vector.shape_cast %57 : vector<16x16x4xbf16> to vector<256x4xbf16>
    %c8 = arith.constant 8 : index
    %c0_27 = arith.constant 0 : index
    %c0_28 = arith.constant 0 : index
    %59 = vector.load %arg3[%c8, %c0_27, %c0_28] : memref<9x4x8xbf16, #tpu.memory_space<vmem>>, vector<1x4x8xbf16>
    %60 = vector.shape_cast %59 : vector<1x4x8xbf16> to vector<4x8xbf16>
    %cst_29 = arith.constant dense<0.000000e+00> : vector<256x8xf32>
    %61 = tpu.matmul %58, %60, %cst_29 {dimension_numbers = #tpu.dot_dimension_numbers<[1], [0], [0], [1], [0, 0, 1, 1], [], []>} : vector<256x4xbf16>, vector<4x8xbf16>, vector<256x8xf32> -> vector<256x8xf32>
    %62 = arith.addf %56, %61 : vector<256x8xf32>
    %cst_30 = arith.constant dense<0.000000e+00> : vector<8xf32>
    %63 = vector.multi_reduction <add>, %62, %cst_30 [0] : vector<256x8xf32> to vector<8xf32>
    %64 = vector.shape_cast %63 : vector<8xf32> to vector<1x8xf32>
    %cst_31 = arith.constant 2.560000e+02 : f32
    %65 = vector.broadcast %cst_31 : f32 to vector<1x8xf32>
    %66 = arith.divf %64, %65 : vector<1x8xf32>
    %67 = vector.broadcast %66 : vector<1x8xf32> to vector<256x8xf32>
    %68 = arith.subf %62, %67 : vector<256x8xf32>
    %69 = arith.mulf %68, %68 : vector<256x8xf32>
    %cst_32 = arith.constant dense<0.000000e+00> : vector<8xf32>
    %70 = vector.multi_reduction <add>, %69, %cst_32 [0] : vector<256x8xf32> to vector<8xf32>
    %71 = vector.shape_cast %70 : vector<8xf32> to vector<1x8xf32>
    %72 = tpu.concatenate %64, %71 in 0 : vector<1x8xf32>, vector<1x8xf32> -> vector<2x8xf32>
    %c0_33 = arith.constant 0 : index
    %c0_34 = arith.constant 0 : index
    %c0_35 = arith.constant 0 : index
    %c0_36 = arith.constant 0 : index
    %73 = vector.load %arg5[%c0_33, %c0_34, %c0_35, %c0_36] : memref<1x1x2x8xf32, #tpu.memory_space<vmem>>, vector<1x1x2x8xf32>
    %74 = vector.shape_cast %73 : vector<1x1x2x8xf32> to vector<2x8xf32>
    %75 = vector.shape_cast %72 : vector<2x8xf32> to vector<1x1x2x8xf32>
    tpu.vector_store %arg5[%c0_33, %c0_34, %c0_35, %c0_36], %75 {strides = array<i32>} : memref<1x1x2x8xf32, #tpu.memory_space<vmem>>, vector<1x1x2x8xf32>,
    %76 = tpu.transpose %62, [1, 0] : vector<256x8xf32> -> vector<8x256xf32>
    %77 = arith.truncf %76 : vector<8x256xf32> to vector<8x256xbf16>
    %c0_37 = arith.constant 0 : index
    %c0_38 = arith.constant 0 : index
    %c0_39 = arith.constant 0 : index
    %78 = vector.load %arg4[%c0_37, %c0_38, %c0_39] : memref<1x8x256xbf16, #tpu.memory_space<vmem>>, vector<1x8x256xbf16>
    %79 = vector.shape_cast %78 : vector<1x8x256xbf16> to vector<8x256xbf16>
    %80 = vector.shape_cast %77 : vector<8x256xbf16> to vector<1x8x256xbf16>
    tpu.vector_store %arg4[%c0_37, %c0_38, %c0_39], %80 {strides = array<i32>} : memref<1x8x256xbf16, #tpu.memory_space<vmem>>, vector<1x8x256xbf16>,
    return
  }
  func.func @transform_0(%arg0: i32, %arg1: i32) -> (i32, i32, i32, i32) {
    %c0_i32 = arith.constant 0 : i32
    %c0_i32_0 = arith.constant 0 : i32
    %c0_i32_1 = arith.constant 0 : i32
    %c0_i32_2 = arith.constant 0 : i32
    return %arg0, %c0_i32, %c0_i32_0, %c0_i32_1 : i32, i32, i32, i32
  }
  func.func @transform_1(%arg0: i32, %arg1: i32) -> (i32, i32, i32) {
    %c0_i32 = arith.constant 0 : i32
    %c0_i32_0 = arith.constant 0 : i32
    %c0_i32_1 = arith.constant 0 : i32
    %c0_i32_2 = arith.constant 0 : i32
    return %c0_i32, %c0_i32_0, %c0_i32_1 : i32, i32, i32
  }
  func.func @transform_2(%arg0: i32, %arg1: i32) -> (i32, i32, i32) {
    %c0_i32 = arith.constant 0 : i32
    %c0_i32_0 = arith.constant 0 : i32
    return %arg0, %c0_i32, %arg1 : i32, i32, i32
  }
  func.func @transform_3(%arg0: i32, %arg1: i32) -> (i32, i32, i32, i32) {
    %c0_i32 = arith.constant 0 : i32
    %c0_i32_0 = arith.constant 0 : i32
    %c0_i32_1 = arith.constant 0 : i32
    return %arg0, %arg1, %c0_i32, %c0_i32_0 : i32, i32, i32, i32
  }
}

module attributes {stable_mosaic.version = 11 : i64} {
  func.func @_bn_lrelu_kernel(%arg0: i32, %arg1: i32, %arg2: memref<1x8x256xbf16, #tpu.memory_space<vmem>>, %arg3: memref<8x1xf32, #tpu.memory_space<vmem>>, %arg4: memref<8x1xf32, #tpu.memory_space<vmem>>, %arg5: memref<1x8x256xf32, #tpu.memory_space<vmem>>) attributes {dimension_semantics = [#tpu.dimension_semantics<parallel>, #tpu.dimension_semantics<parallel>], iteration_bounds = array<i64: 2, 1>, scalar_prefetch = 0 : i64, scratch_operands = 0 : i64, tpu.core_type = #tpu.core_type<tc>, window_params = [{transform_indices = @transform_0, window_bounds = array<i64: 1, 8, 256>}, {pipeline_mode = #tpu.pipeline_mode<synchronous>, transform_indices = @transform_1, window_bounds = array<i64: 8, 1>}, {pipeline_mode = #tpu.pipeline_mode<synchronous>, transform_indices = @transform_2, window_bounds = array<i64: 8, 1>}, {transform_indices = @transform_3, window_bounds = array<i64: 1, 8, 256>}]} {
    %c0 = arith.constant 0 : index
    %c0_0 = arith.constant 0 : index
    %c0_1 = arith.constant 0 : index
    %0 = vector.load %arg2[%c0, %c0_0, %c0_1] : memref<1x8x256xbf16, #tpu.memory_space<vmem>>, vector<1x8x256xbf16>
    %1 = vector.shape_cast %0 : vector<1x8x256xbf16> to vector<8x256xbf16>
    %2 = arith.extf %1 : vector<8x256xbf16> to vector<8x256xf32>
    %c0_2 = arith.constant 0 : index
    %c0_3 = arith.constant 0 : index
    %3 = vector.load %arg3[%c0_2, %c0_3] : memref<8x1xf32, #tpu.memory_space<vmem>>, vector<8x1xf32>
    %4 = vector.broadcast %3 : vector<8x1xf32> to vector<8x256xf32>
    %5 = arith.mulf %2, %4 : vector<8x256xf32>
    %c0_4 = arith.constant 0 : index
    %c0_5 = arith.constant 0 : index
    %6 = vector.load %arg4[%c0_4, %c0_5] : memref<8x1xf32, #tpu.memory_space<vmem>>, vector<8x1xf32>
    %7 = vector.broadcast %6 : vector<8x1xf32> to vector<8x256xf32>
    %8 = arith.addf %5, %7 : vector<8x256xf32>
    %cst = arith.constant 0.000000e+00 : f32
    %9 = vector.broadcast %cst : f32 to vector<8x256xf32>
    %10 = arith.cmpf oge, %8, %9 : vector<8x256xf32>
    %cst_6 = arith.constant 5.000000e-02 : f32
    %11 = vector.broadcast %cst_6 : f32 to vector<8x256xf32>
    %12 = arith.mulf %11, %8 : vector<8x256xf32>
    %13 = arith.select %10, %8, %12 : vector<8x256xi1>, vector<8x256xf32>
    %c0_7 = arith.constant 0 : index
    %c0_8 = arith.constant 0 : index
    %c0_9 = arith.constant 0 : index
    %14 = vector.load %arg5[%c0_7, %c0_8, %c0_9] : memref<1x8x256xf32, #tpu.memory_space<vmem>>, vector<1x8x256xf32>
    %15 = vector.shape_cast %14 : vector<1x8x256xf32> to vector<8x256xf32>
    %16 = vector.shape_cast %13 : vector<8x256xf32> to vector<1x8x256xf32>
    tpu.vector_store %arg5[%c0_7, %c0_8, %c0_9], %16 {strides = array<i32>} : memref<1x8x256xf32, #tpu.memory_space<vmem>>, vector<1x8x256xf32>,
    return
  }
  func.func @transform_0(%arg0: i32, %arg1: i32) -> (i32, i32, i32) {
    %c0_i32 = arith.constant 0 : i32
    %c0_i32_0 = arith.constant 0 : i32
    return %arg0, %c0_i32, %arg1 : i32, i32, i32
  }
  func.func @transform_1(%arg0: i32, %arg1: i32) -> (i32, i32) {
    %c0_i32 = arith.constant 0 : i32
    %c0_i32_0 = arith.constant 0 : i32
    %c0_i32_1 = arith.constant 0 : i32
    return %c0_i32, %c0_i32_0 : i32, i32
  }
  func.func @transform_2(%arg0: i32, %arg1: i32) -> (i32, i32) {
    %c0_i32 = arith.constant 0 : i32
    %c0_i32_0 = arith.constant 0 : i32
    %c0_i32_1 = arith.constant 0 : i32
    return %c0_i32, %c0_i32_0 : i32, i32
  }
  func.func @transform_3(%arg0: i32, %arg1: i32) -> (i32, i32, i32) {
    %c0_i32 = arith.constant 0 : i32
    %c0_i32_0 = arith.constant 0 : i32
    return %arg0, %c0_i32, %arg1 : i32, i32, i32
  }
}

</mosaic_0001>

<llo_original>
// kernel: conv_norm_relu.3
$region0: #{conv_norm_relu.3}
  #allocation0 [shape = 'u32[]', space=smem, size = 0x4, offset = 0x4, fixed_abs, tag = 'smem constant byte address 0x4 - core index']
  #allocation1 [shape = 'u32[72,128]{1,0:T(1,128)}', space=vmem, size = 0x9000, scoped, tag = 'internal scratch']
  %s0 = inlined_call_operand.vmem [shape: bf16[2,8,256], index: 0, kind: input, shape index: {}]
  %s1 = inlined_call_operand.vmem [shape: f32[8,1], index: 1, kind: input, shape index: {}]
  %s2 = inlined_call_operand.vmem [shape: f32[8,1], index: 2, kind: input, shape index: {}]
  %s3 = inlined_call_operand.vmem [shape: f32[2,8,256], index: 3, kind: output, shape index: {}]
  %s4 = sld [smem:[#allocation0]]
  $region45: #{conv_norm_relu.3} parent=0
    _
  %s6 = ssub.s32 1, %s4
  %s7 = scalar_select 0, %s6, %s4
  loop: start=0, step=1, limit=4
  $region2: #{conv_norm_relu.3} parent=0 // loop_pre_header
    _
  $region3: #{conv_norm_relu.3} parent=0 // loop_header
    %s9 = sphi 0, %s13
    %p10 = scmp.ge.s32.totalorder %s9, 4
    %s16 = sphi 0, %s28
    %s17 = sphi 0, %s24
    %s18 = sphi 0, %s16
    %s19 = sphi 0, %s17
    %s20 = sphi 0, %s18
    %s21 = sphi 0, %s19
    %s33 = sphi 0, %s35
    %s36 = sphi 0, %s33
    %s37 = sphi 0, %s36
    %s53 = sphi 0, %s37
    %s57 = sphi 0, %s57
    %s59 = sphi 0, %s57
    %s60 = sphi 0, %s59
    %s74 = sphi 0, %s60
    %s78 = sphi 0, %s78
    %s80 = sphi 0, %s78
    %s81 = sphi 0, %s80
    %s95 = sphi 0, %s81
    %s103 = sphi 0, %s105
    %s106 = sphi 0, %s103
    %s107 = sphi 0, %s106
    %s123 = sphi 0, %s107
  $region4: #{conv_norm_relu.3} parent=0 // loop_header_branch
    %12 = sbr.rel (%p10) target = $region8
  $region5: #{conv_norm_relu.3} parent=0 // loop_body
    %s14 = ssub.s32 %s9, 1
    %s15 = ssub.s32 %s9, 2
    %s22 = sadd.s32 1, %s17
    %p23 = scmp.ge.s32.totalorder %s22, 1
    %s24 = scalar_select %p23, 0, %s22
    %s25 = sadd.s32 1, %s16
    %s26 = scalar_select %p23, %s25, %s16
    %p27 = scmp.ge.s32.totalorder %s26, 2
    %s28 = scalar_select %p27, 0, %s26
    %s29 = ssub.s32 %s16, %s28
    %s30 = ssub.s32 %s17, %s24
    %s31 = sor.u32 %s29, %s30
    %p32 = scmp.eq.s32.totalorder %s31, 0
    %s34 = sadd.s32 %s33, 1
    %s35 = scalar_select %p32, %s33, %s34
    %p38 = pneg %p32
    %p39 = scmp.eq.s32.totalorder %s9, 1
    %p40 = por %p38, %p39
    %p41 = scmp.ne.s32.totalorder %s33, %s36
    %p42 = scmp.eq.s32.totalorder %s9, 0
    %p43 = por %p41, %p42
    %p44 = scmp.ne.s32.totalorder %s33, %s36
    %p45 = scmp.eq.s32.totalorder %s14, 1
    %p46 = por %p44, %p45
    %p47 = scmp.ne.s32.totalorder %s36, %s37
    %p48 = scmp.eq.s32.totalorder %s14, 0
    %p49 = por %p47, %p48
    %p50 = scmp.ne.s32.totalorder %s36, %s37
    %p51 = scmp.eq.s32.totalorder %s15, 1
    %p52 = por %p50, %p51
    %p54 = scmp.ne.s32.totalorder %s37, %s53
    %p55 = scmp.eq.s32.totalorder %s15, 0
    %p56 = por %p54, %p55
    %s58 = sadd.s32 %s57, 1
    %p61 = scmp.eq.s32.totalorder %s9, 1
    %p62 = scmp.ne.s32.totalorder %s57, %s59
    %p63 = scmp.eq.s32.totalorder %s9, 0
    %p64 = por %p62, %p63
    %p65 = scmp.ne.s32.totalorder %s57, %s59
    %p66 = scmp.eq.s32.totalorder %s14, 1
    %p67 = por %p65, %p66
    %p68 = scmp.ne.s32.totalorder %s59, %s60
    %p69 = scmp.eq.s32.totalorder %s14, 0
    %p70 = por %p68, %p69
    %p71 = scmp.ne.s32.totalorder %s59, %s60
    %p72 = scmp.eq.s32.totalorder %s15, 1
    %p73 = por %p71, %p72
    %p75 = scmp.ne.s32.totalorder %s60, %s74
    %p76 = scmp.eq.s32.totalorder %s15, 0
    %p77 = por %p75, %p76
    %s79 = sadd.s32 %s78, 1
    %p82 = scmp.eq.s32.totalorder %s9, 1
    %p83 = scmp.ne.s32.totalorder %s78, %s80
    %p84 = scmp.eq.s32.totalorder %s9, 0
    %p85 = por %p83, %p84
    %p86 = scmp.ne.s32.totalorder %s78, %s80
    %p87 = scmp.eq.s32.totalorder %s14, 1
    %p88 = por %p86, %p87
    %p89 = scmp.ne.s32.totalorder %s80, %s81
    %p90 = scmp.eq.s32.totalorder %s14, 0
    %p91 = por %p89, %p90
    %p92 = scmp.ne.s32.totalorder %s80, %s81
    %p93 = scmp.eq.s32.totalorder %s15, 1
    %p94 = por %p92, %p93
    %p96 = scmp.ne.s32.totalorder %s81, %s95
    %p97 = scmp.eq.s32.totalorder %s15, 0
    %p98 = por %p96, %p97
    %s99 = ssub.s32 %s16, %s28
    %s100 = ssub.s32 %s17, %s24
    %s101 = sor.u32 %s99, %s100
    %p102 = scmp.eq.s32.totalorder %s101, 0
    %s104 = sadd.s32 %s103, 1
    %s105 = scalar_select %p102, %s103, %s104
    %p108 = pneg %p102
    %p109 = scmp.eq.s32.totalorder %s9, 1
    %p110 = por %p108, %p109
    %p111 = scmp.ne.s32.totalorder %s103, %s106
    %p112 = scmp.eq.s32.totalorder %s9, 0
    %p113 = por %p111, %p112
    %p114 = scmp.ne.s32.totalorder %s103, %s106
    %p115 = scmp.eq.s32.totalorder %s14, 1
    %p116 = por %p114, %p115
    %p117 = scmp.ne.s32.totalorder %s106, %s107
    %p118 = scmp.eq.s32.totalorder %s14, 0
    %p119 = por %p117, %p118
    %p120 = scmp.ne.s32.totalorder %s106, %s107
    %p121 = scmp.eq.s32.totalorder %s15, 1
    %p122 = por %p120, %p121
    %p124 = scmp.ne.s32.totalorder %s107, %s123
    %p125 = scmp.eq.s32.totalorder %s15, 0
    %p126 = por %p124, %p125
    %p127 = scmp.le.s32.totalorder 1, %s9
    %p128 = scmp.lt.s32.totalorder %s9, 3
    %p129 = pnand %p127, %p128
    %p130 = pneg %p129
    // Predicated region
    $region9: #{conv_norm_relu.3} parent=5 // pred_check
      _
    $region10: #{conv_norm_relu.3} parent=5 // pred_check_branch
      %132 = sbr.rel (%p129) target = $region12
    $region11: #{conv_norm_relu.3} parent=5 // pred_region
      %s133 = ssub.s32 %s9, 1
      // Predicated region
      $region13: #{conv_norm_relu.3} parent=11 // pred_check
        %p134 = pneg %p70
      $region14: #{conv_norm_relu.3} parent=11 // pred_check_branch
        %136 = sbr.rel (%p134) target = $region16
      $region15: #{conv_norm_relu.3} parent=11 // pred_region
        _
      $region16: #{conv_norm_relu.3} parent=11 // pred_fallthru
        _
      // Predicated region
      $region17: #{conv_norm_relu.3} parent=11 // pred_check
        %p137 = pneg %p91
      $region18: #{conv_norm_relu.3} parent=11 // pred_check_branch
        %139 = sbr.rel (%p137) target = $region20
      $region19: #{conv_norm_relu.3} parent=11 // pred_region
        _
      $region20: #{conv_norm_relu.3} parent=11 // pred_fallthru
        _
    $region12: #{conv_norm_relu.3} parent=5 // pred_fallthru
      _
    %p140 = scmp.lt.s32.totalorder %s9, 2
    // Predicated region
    $region21: #{conv_norm_relu.3} parent=5 // pred_check
      %p141 = pneg %p140
    $region22: #{conv_norm_relu.3} parent=5 // pred_check_branch
      %143 = sbr.rel (%p141) target = $region24
    $region23: #{conv_norm_relu.3} parent=5 // pred_region
      // Predicated region
      $region25: #{conv_norm_relu.3} parent=23 // pred_check
        %p144 = pneg %p43
      $region26: #{conv_norm_relu.3} parent=23 // pred_check_branch
        %146 = sbr.rel (%p144) target = $region28
      $region27: #{conv_norm_relu.3} parent=23 // pred_region
        %s147 = smul.u32 2, %s17
        %p148 = scmp.lt.s32.totalorder %s16, 1
        %s149 = scalar_select %p148, %s16, 1
        %p150 = scmp.lt.s32.totalorder %s147, 1
        %s151 = scalar_select %p150, %s147, 1
        %s152 = smul.addr %s149, 2
        %s153 = sadd.s32 %s151, %s152
        %s154 = smul.addr %s153, 4
        %s155 = scalar_lea.vmem %s0, %s154
        %s156 = smul.u32 2, %s17
      $region28: #{conv_norm_relu.3} parent=23 // pred_fallthru
        _
    $region24: #{conv_norm_relu.3} parent=5 // pred_fallthru
      _
    %p157 = scmp.le.s32.totalorder 1, %s9
    %p158 = scmp.lt.s32.totalorder %s9, 3
    %p159 = pnand %p157, %p158
    %p160 = pneg %p159
    // Predicated region
    $region29: #{conv_norm_relu.3} parent=5 // pred_check
      _
    $region30: #{conv_norm_relu.3} parent=5 // pred_check_branch
      %162 = sbr.rel (%p159) target = $region32
    $region31: #{conv_norm_relu.3} parent=5 // pred_region
      %s163 = ssub.s32 %s9, 1
      %s164 = smul.u32 2, %s19
      %p165 = scmp.lt.s32.totalorder %s18, 1
      %s166 = scalar_select %p165, %s18, 1
      %p167 = scmp.lt.s32.totalorder %s164, 1
      %s168 = scalar_select %p167, %s164, 1
      %s169 = smul.addr %s166, 2
      %s170 = sadd.s32 %s168, %s169
      %s171 = smul.addr %s170, 4
      %s172 = scalar_lea.vmem %s0, %s171
      %p173 = pneg %p49
      %p174 = pneg %p46
      %p175 = pneg %p70
      %p176 = pneg %p67
      %p177 = pneg %p91
      %p178 = pneg %p88
      %p179 = pneg %p119
      %p180 = pneg %p116
      %s181 = smul.u32 2, %s19
      %p182 = scmp.lt.s32.totalorder %s18, 1
      %s183 = scalar_select %p182, %s18, 1
      %p184 = scmp.lt.s32.totalorder %s181, 1
      %s185 = scalar_select %p184, %s181, 1
      %s186 = smul.addr %s183, 2
      %s187 = sadd.s32 %s185, %s186
      %s188 = smul.addr %s187, 8
      %s189 = scalar_lea.vmem %s3, %s188
      %s190 = smul.u32 2, %s19
      %p191 = scmp.lt.s32.totalorder %s18, 1
      %s192 = scalar_select %p191, %s18, 1
      %p193 = scmp.lt.s32.totalorder %s190, 1
      %s194 = scalar_select %p193, %s190, 1
      %s195 = smul.addr %s192, 2
      %s196 = sadd.s32 %s194, %s195
      %s197 = smul.addr %s196, 4
      %s198 = scalar_lea.vmem %s0, %s197
      %s199 = smul.u32 2, %s19
      %s200 = smul.u32 2, %s19
      %p201 = scmp.lt.s32.totalorder %s18, 1
      %s202 = scalar_select %p201, %s18, 1
      %p203 = scmp.lt.s32.totalorder %s200, 1
      %s204 = scalar_select %p203, %s200, 1
      %s205 = smul.addr %s202, 2
      %s206 = sadd.s32 %s204, %s205
      %s207 = smul.addr %s206, 8
      %s208 = scalar_lea.vmem %s3, %s207
      %s209 = smul.u32 2, %s19
      %v210 = vld [vmem:[%s198] sm:$0xff]
      %v211 = vunpack.c.l.bf16 %v210
      %v212 = vunpack.c.h.bf16 %v210
      %v213 = vld [vmem:[%s1] sm:$0xff]
      %215 = vset.pattern.permute.xlu0 0
      %216 = vperm.xlu0 %215, %v213
      %v217 = vpop.permute.xlu0 %216
      %v219 = vmul.f32 %v211, %v217
      %v220 = vmul.f32 %v212, %v217
      %v221 = vld [vmem:[%s2] sm:$0xff]
      %223 = vset.pattern.permute.xlu0 0
      %224 = vperm.xlu0 %223, %v221
      %v225 = vpop.permute.xlu0 %224
      %v227 = vadd.f32 %v219, %v225
      %v228 = vadd.f32 %v220, %v225
      %vm229 = vcmp.ge.f32.partialorder %v227, 0.0
      %vm230 = vcmp.ge.f32.partialorder %v228, 0.0
      %v231 = vmul.f32 %v227, 0.05
      %v232 = vmul.f32 %v228, 0.05
      %v233 = vsel %vm229, %v227, %v231
      %v234 = vsel %vm230, %v228, %v232
      %235 = vst [vmem:[%s208] sm:$0xff] %v233
      %236 = vst [vmem:[%s208 + $0x8] sm:$0xff] %v234
      %s237 = smul.u32 2, %s19
      %p238 = scmp.lt.s32.totalorder %s18, 1
      %s239 = scalar_select %p238, %s18, 1
      %p240 = scmp.lt.s32.totalorder %s237, 1
      %s241 = scalar_select %p240, %s237, 1
      %s242 = smul.addr %s239, 2
      %s243 = sadd.s32 %s241, %s242
      %s244 = smul.addr %s243, 8
      %s245 = scalar_lea.vmem %s3, %s244
      // Predicated region
      $region33: #{conv_norm_relu.3} parent=31 // pred_check
        %p246 = pneg %p116
      $region34: #{conv_norm_relu.3} parent=31 // pred_check_branch
        %248 = sbr.rel (%p246) target = $region36
      $region35: #{conv_norm_relu.3} parent=31 // pred_region
        %s249 = smul.u32 2, %s19
      $region36: #{conv_norm_relu.3} parent=31 // pred_fallthru
        _
    $region32: #{conv_norm_relu.3} parent=5 // pred_fallthru
      _
    %p250 = scmp.le.s32.totalorder 2, %s9
    // Predicated region
    $region37: #{conv_norm_relu.3} parent=5 // pred_check
      %p251 = pneg %p250
    $region38: #{conv_norm_relu.3} parent=5 // pred_check_branch
      %253 = sbr.rel (%p251) target = $region40
    $region39: #{conv_norm_relu.3} parent=5 // pred_region
      %s254 = ssub.s32 %s9, 2
      // Predicated region
      $region41: #{conv_norm_relu.3} parent=39 // pred_check
        %p255 = pneg %p122
      $region42: #{conv_norm_relu.3} parent=39 // pred_check_branch
        %257 = sbr.rel (%p255) target = $region44
      $region43: #{conv_norm_relu.3} parent=39 // pred_region
        %s258 = smul.u32 2, %s21
        %p259 = scmp.lt.s32.totalorder %s20, 1
        %s260 = scalar_select %p259, %s20, 1
        %p261 = scmp.lt.s32.totalorder %s258, 1
        %s262 = scalar_select %p261, %s258, 1
        %s263 = smul.addr %s260, 2
        %s264 = sadd.s32 %s262, %s263
        %s265 = smul.addr %s264, 8
        %s266 = scalar_lea.vmem %s3, %s265
      $region44: #{conv_norm_relu.3} parent=39 // pred_fallthru
        _
    $region40: #{conv_norm_relu.3} parent=5 // pred_fallthru
      _
  $region6: #{conv_norm_relu.3} parent=0 // loop_footer
    %s13 = sadd.s32 1, %s9
  $region7: #{conv_norm_relu.3} parent=0 // loop_footer_branch
    %8 = sbr.rel target = $region3
  $region8: #{conv_norm_relu.3} parent=0 // loop_exit
    _

// kernel: conv_norm_relu.2
$region0: #{conv_norm_relu.2}
  #allocation0 [shape = 'u32[]', space=smem, size = 0x4, offset = 0x4, fixed_abs, tag = 'smem constant byte address 0x4 - core index']
  #allocation1 [shape = 'u32[72,128]{1,0:T(1,128)}', space=vmem, size = 0x9000, scoped, tag = 'internal scratch']
  %s0 = inlined_call_operand.vmem [shape: bf16[2,18,18,4], index: 0, kind: input, shape index: {}]
  %s1 = inlined_call_operand.vmem [shape: bf16[9,4,8], index: 1, kind: input, shape index: {}]
  %s2 = inlined_call_operand.vmem [shape: bf16[2,8,256], index: 2, kind: output, shape index: {0}]
  %s3 = inlined_call_operand.vmem [shape: f32[2,1,2,8], index: 3, kind: output, shape index: {1}]
  %4 = xla_tuple %s2, %s3
  %s5 = sld [smem:[#allocation0]]
  $region49: #{conv_norm_relu.2} parent=0
    _
  %s7 = ssub.s32 1, %s5
  %s8 = scalar_select 0, %s7, %s5
  loop: start=0, step=1, limit=4
  $region2: #{conv_norm_relu.2} parent=0 // loop_pre_header
    _
  $region3: #{conv_norm_relu.2} parent=0 // loop_header
    %s10 = sphi 0, %s14
    %p11 = scmp.ge.s32.totalorder %s10, 4
    %s17 = sphi 0, %s29
    %s18 = sphi 0, %s25
    %s19 = sphi 0, %s17
    %s20 = sphi 0, %s18
    %s21 = sphi 0, %s19
    %s22 = sphi 0, %s20
    %s32 = sphi 0, %s34
    %s35 = sphi 0, %s32
    %s36 = sphi 0, %s35
    %s52 = sphi 0, %s36
    %s56 = sphi 0, %s56
    %s58 = sphi 0, %s56
    %s59 = sphi 0, %s58
    %s73 = sphi 0, %s59
    %s81 = sphi 0, %s83
    %s84 = sphi 0, %s81
    %s85 = sphi 0, %s84
    %s101 = sphi 0, %s85
    %s109 = sphi 0, %s111
    %s112 = sphi 0, %s109
    %s113 = sphi 0, %s112
    %s129 = sphi 0, %s113
  $region4: #{conv_norm_relu.2} parent=0 // loop_header_branch
    %13 = sbr.rel (%p11) target = $region8
  $region5: #{conv_norm_relu.2} parent=0 // loop_body
    %s15 = ssub.s32 %s10, 1
    %s16 = ssub.s32 %s10, 2
    %s23 = sadd.s32 1, %s18
    %p24 = scmp.ge.s32.totalorder %s23, 1
    %s25 = scalar_select %p24, 0, %s23
    %s26 = sadd.s32 1, %s17
    %s27 = scalar_select %p24, %s26, %s17
    %p28 = scmp.ge.s32.totalorder %s27, 2
    %s29 = scalar_select %p28, 0, %s27
    %s30 = ssub.s32 %s17, %s29
    %p31 = scmp.eq.s32.totalorder %s30, 0
    %s33 = sadd.s32 %s32, 1
    %s34 = scalar_select %p31, %s32, %s33
    %p37 = pneg %p31
    %p38 = scmp.eq.s32.totalorder %s10, 1
    %p39 = por %p37, %p38
    %p40 = scmp.ne.s32.totalorder %s32, %s35
    %p41 = scmp.eq.s32.totalorder %s10, 0
    %p42 = por %p40, %p41
    %p43 = scmp.ne.s32.totalorder %s32, %s35
    %p44 = scmp.eq.s32.totalorder %s15, 1
    %p45 = por %p43, %p44
    %p46 = scmp.ne.s32.totalorder %s35, %s36
    %p47 = scmp.eq.s32.totalorder %s15, 0
    %p48 = por %p46, %p47
    %p49 = scmp.ne.s32.totalorder %s35, %s36
    %p50 = scmp.eq.s32.totalorder %s16, 1
    %p51 = por %p49, %p50
    %p53 = scmp.ne.s32.totalorder %s36, %s52
    %p54 = scmp.eq.s32.totalorder %s16, 0
    %p55 = por %p53, %p54
    %s57 = sadd.s32 %s56, 1
    %p60 = scmp.eq.s32.totalorder %s10, 1
    %p61 = scmp.ne.s32.totalorder %s56, %s58
    %p62 = scmp.eq.s32.totalorder %s10, 0
    %p63 = por %p61, %p62
    %p64 = scmp.ne.s32.totalorder %s56, %s58
    %p65 = scmp.eq.s32.totalorder %s15, 1
    %p66 = por %p64, %p65
    %p67 = scmp.ne.s32.totalorder %s58, %s59
    %p68 = scmp.eq.s32.totalorder %s15, 0
    %p69 = por %p67, %p68
    %p70 = scmp.ne.s32.totalorder %s58, %s59
    %p71 = scmp.eq.s32.totalorder %s16, 1
    %p72 = por %p70, %p71
    %p74 = scmp.ne.s32.totalorder %s59, %s73
    %p75 = scmp.eq.s32.totalorder %s16, 0
    %p76 = por %p74, %p75
    %s77 = ssub.s32 %s17, %s29
    %s78 = ssub.s32 %s18, %s25
    %s79 = sor.u32 %s77, %s78
    %p80 = scmp.eq.s32.totalorder %s79, 0
    %s82 = sadd.s32 %s81, 1
    %s83 = scalar_select %p80, %s81, %s82
    %p86 = pneg %p80
    %p87 = scmp.eq.s32.totalorder %s10, 1
    %p88 = por %p86, %p87
    %p89 = scmp.ne.s32.totalorder %s81, %s84
    %p90 = scmp.eq.s32.totalorder %s10, 0
    %p91 = por %p89, %p90
    %p92 = scmp.ne.s32.totalorder %s81, %s84
    %p93 = scmp.eq.s32.totalorder %s15, 1
    %p94 = por %p92, %p93
    %p95 = scmp.ne.s32.totalorder %s84, %s85
    %p96 = scmp.eq.s32.totalorder %s15, 0
    %p97 = por %p95, %p96
    %p98 = scmp.ne.s32.totalorder %s84, %s85
    %p99 = scmp.eq.s32.totalorder %s16, 1
    %p100 = por %p98, %p99
    %p102 = scmp.ne.s32.totalorder %s85, %s101
    %p103 = scmp.eq.s32.totalorder %s16, 0
    %p104 = por %p102, %p103
    %s105 = ssub.s32 %s17, %s29
    %s106 = ssub.s32 %s18, %s25
    %s107 = sor.u32 %s105, %s106
    %p108 = scmp.eq.s32.totalorder %s107, 0
    %s110 = sadd.s32 %s109, 1
    %s111 = scalar_select %p108, %s109, %s110
    %p114 = pneg %p108
    %p115 = scmp.eq.s32.totalorder %s10, 1
    %p116 = por %p114, %p115
    %p117 = scmp.ne.s32.totalorder %s109, %s112
    %p118 = scmp.eq.s32.totalorder %s10, 0
    %p119 = por %p117, %p118
    %p120 = scmp.ne.s32.totalorder %s109, %s112
    %p121 = scmp.eq.s32.totalorder %s15, 1
    %p122 = por %p120, %p121
    %p123 = scmp.ne.s32.totalorder %s112, %s113
    %p124 = scmp.eq.s32.totalorder %s15, 0
    %p125 = por %p123, %p124
    %p126 = scmp.ne.s32.totalorder %s112, %s113
    %p127 = scmp.eq.s32.totalorder %s16, 1
    %p128 = por %p126, %p127
    %p130 = scmp.ne.s32.totalorder %s113, %s129
    %p131 = scmp.eq.s32.totalorder %s16, 0
    %p132 = por %p130, %p131
    %p133 = scmp.le.s32.totalorder 1, %s10
    %p134 = scmp.lt.s32.totalorder %s10, 3
    %p135 = pnand %p133, %p134
    %p136 = pneg %p135
    // Predicated region
    $region9: #{conv_norm_relu.2} parent=5 // pred_check
      _
    $region10: #{conv_norm_relu.2} parent=5 // pred_check_branch
      %138 = sbr.rel (%p135) target = $region12
    $region11: #{conv_norm_relu.2} parent=5 // pred_region
      %s139 = ssub.s32 %s10, 1
      // Predicated region
      $region13: #{conv_norm_relu.2} parent=11 // pred_check
        %p140 = pneg %p69
      $region14: #{conv_norm_relu.2} parent=11 // pred_check_branch
        %142 = sbr.rel (%p140) target = $region16
      $region15: #{conv_norm_relu.2} parent=11 // pred_region
        _
      $region16: #{conv_norm_relu.2} parent=11 // pred_fallthru
        _
    $region12: #{conv_norm_relu.2} parent=5 // pred_fallthru
      _
    %p143 = scmp.lt.s32.totalorder %s10, 2
    // Predicated region
    $region17: #{conv_norm_relu.2} parent=5 // pred_check
      %p144 = pneg %p143
    $region18: #{conv_norm_relu.2} parent=5 // pred_check_branch
      %146 = sbr.rel (%p144) target = $region20
    $region19: #{conv_norm_relu.2} parent=5 // pred_region
      // Predicated region
      $region21: #{conv_norm_relu.2} parent=19 // pred_check
        %p147 = pneg %p42
      $region22: #{conv_norm_relu.2} parent=19 // pred_check_branch
        %149 = sbr.rel (%p147) target = $region24
      $region23: #{conv_norm_relu.2} parent=19 // pred_region
        %p150 = scmp.lt.s32.totalorder %s17, 1
        %s151 = scalar_select %p150, %s17, 1
        %s152 = smul.addr %s151, 54
        %s153 = smul.addr %s152, 4
        %s154 = scalar_lea.vmem %s0, %s153
      $region24: #{conv_norm_relu.2} parent=19 // pred_fallthru
        _
    $region20: #{conv_norm_relu.2} parent=5 // pred_fallthru
      _
    %p155 = scmp.le.s32.totalorder 1, %s10
    %p156 = scmp.lt.s32.totalorder %s10, 3
    %p157 = pnand %p155, %p156
    %p158 = pneg %p157
    // Predicated region
    $region25: #{conv_norm_relu.2} parent=5 // pred_check
      _
    $region26: #{conv_norm_relu.2} parent=5 // pred_check_branch
      %160 = sbr.rel (%p157) target = $region28
    $region27: #{conv_norm_relu.2} parent=5 // pred_region
      %s161 = ssub.s32 %s10, 1
      %p162 = scmp.lt.s32.totalorder %s19, 1
      %s163 = scalar_select %p162, %s19, 1
      %s164 = smul.addr %s163, 54
      %s165 = smul.addr %s164, 4
      %s166 = scalar_lea.vmem %s0, %s165
      %p167 = pneg %p48
      %p168 = pneg %p45
      %p169 = pneg %p69
      %p170 = pneg %p66
      %p171 = pneg %p97
      %p172 = pneg %p94
      %s173 = smul.u32 2, %s20
      %p174 = scmp.lt.s32.totalorder %s19, 1
      %s175 = scalar_select %p174, %s19, 1
      %p176 = scmp.lt.s32.totalorder %s173, 1
      %s177 = scalar_select %p176, %s173, 1
      %s178 = smul.addr %s175, 2
      %s179 = sadd.s32 %s177, %s178
      %s180 = smul.addr %s179, 4
      %s181 = scalar_lea.vmem %s2, %s180
      %p182 = pneg %p125
      %p183 = pneg %p122
      %p184 = scmp.lt.s32.totalorder %s19, 1
      %s185 = scalar_select %p184, %s19, 1
      %p186 = scmp.lt.s32.totalorder %s20, 0
      %s187 = scalar_select %p186, %s20, 0
      %s188 = sadd.s32 %s187, %s185
      %s189 = smul.addr %s188, 2
      %s190 = scalar_lea.vmem %s3, %s189
      %p191 = scmp.lt.s32.totalorder %s19, 1
      %s192 = scalar_select %p191, %s19, 1
      %s193 = smul.addr %s192, 54
      %s194 = smul.addr %s193, 4
      %s195 = scalar_lea.vmem %s0, %s194
      %s196 = smul.u32 2, %s20
      %p197 = scmp.lt.s32.totalorder %s19, 1
      %s198 = scalar_select %p197, %s19, 1
      %p199 = scmp.lt.s32.totalorder %s196, 1
      %s200 = scalar_select %p199, %s196, 1
      %s201 = smul.addr %s198, 2
      %s202 = sadd.s32 %s200, %s201
      %s203 = smul.addr %s202, 4
      %s204 = scalar_lea.vmem %s2, %s203
      %s205 = smul.u32 2, %s20
      %p206 = scmp.lt.s32.totalorder %s19, 1
      %s207 = scalar_select %p206, %s19, 1
      %p208 = scmp.lt.s32.totalorder %s20, 0
      %s209 = scalar_select %p208, %s20, 0
      %s210 = sadd.s32 %s209, %s207
      %s211 = smul.addr %s210, 2
      %s212 = scalar_lea.vmem %s3, %s211
      %s214 = smul.u32 %s20, 16
      %s215 = smul.u32 %s214, 3
      %s216 = smul.addr %s215, 4
      %s217 = scalar_lea.vmem %s195, %s216
      %v218 = vld [vmem:[%s217] sm:$0xf]
      %v219 = vld [vmem:[%s217 + $0x4] sm:$0xf]
      %v220 = vld [vmem:[%s217 + $0x8] sm:$0x1]
      %v221 = vld [vmem:[%s217 + $0xc] sm:$0xf]
      %v222 = vld [vmem:[%s217 + $0x10] sm:$0xf]
      %v223 = vld [vmem:[%s217 + $0x14] sm:$0x1]
      %v224 = vld [vmem:[%s217 + $0x18] sm:$0xf]
      %v225 = vld [vmem:[%s217 + $0x1c] sm:$0xf]
      %v226 = vld [vmem:[%s217 + $0x20] sm:$0x1]
      %v227 = vld [vmem:[%s217 + $0x24] sm:$0xf]
      %v228 = vld [vmem:[%s217 + $0x28] sm:$0xf]
      %v229 = vld [vmem:[%s217 + $0x2c] sm:$0x1]
      %v230 = vld [vmem:[%s217 + $0x30] sm:$0xf]
      %v231 = vld [vmem:[%s217 + $0x34] sm:$0xf]
      %v232 = vld [vmem:[%s217 + $0x38] sm:$0x1]
      %v233 = vld [vmem:[%s217 + $0x3c] sm:$0xf]
      %v234 = vld [vmem:[%s217 + $0x40] sm:$0xf]
      %v235 = vld [vmem:[%s217 + $0x44] sm:$0x1]
      %v236 = vld [vmem:[%s217 + $0x48] sm:$0xf]
      %v237 = vld [vmem:[%s217 + $0x4c] sm:$0xf]
      %v238 = vld [vmem:[%s217 + $0x50] sm:$0x1]
      %v239 = vld [vmem:[%s217 + $0x54] sm:$0xf]
      %v240 = vld [vmem:[%s217 + $0x58] sm:$0xf]
      %v241 = vld [vmem:[%s217 + $0x5c] sm:$0x1]
      %v242 = vld [vmem:[%s217 + $0x60] sm:$0xf]
      %v243 = vld [vmem:[%s217 + $0x64] sm:$0xf]
      %v244 = vld [vmem:[%s217 + $0x68] sm:$0x1]
      %v245 = vld [vmem:[%s217 + $0x6c] sm:$0xf]
      %v246 = vld [vmem:[%s217 + $0x70] sm:$0xf]
      %v247 = vld [vmem:[%s217 + $0x74] sm:$0x1]
      %v248 = vld [vmem:[%s217 + $0x78] sm:$0xf]
      %v249 = vld [vmem:[%s217 + $0x7c] sm:$0xf]
      %v250 = vld [vmem:[%s217 + $0x80] sm:$0x1]
      %v251 = vld [vmem:[%s217 + $0x84] sm:$0xf]
      %v252 = vld [vmem:[%s217 + $0x88] sm:$0xf]
      %v253 = vld [vmem:[%s217 + $0x8c] sm:$0x1]
      %v254 = vld [vmem:[%s217 + $0x90] sm:$0xf]
      %v255 = vld [vmem:[%s217 + $0x94] sm:$0xf]
      %v256 = vld [vmem:[%s217 + $0x98] sm:$0x1]
      %v257 = vld [vmem:[%s217 + $0x9c] sm:$0xf]
      %v258 = vld [vmem:[%s217 + $0xa0] sm:$0xf]
      %v259 = vld [vmem:[%s217 + $0xa4] sm:$0x1]
      %v260 = vld [vmem:[%s217 + $0xa8] sm:$0xf]
      %v261 = vld [vmem:[%s217 + $0xac] sm:$0xf]
      %v262 = vld [vmem:[%s217 + $0xb0] sm:$0x1]
      %v263 = vld [vmem:[%s217 + $0xb4] sm:$0xf]
      %v264 = vld [vmem:[%s217 + $0xb8] sm:$0xf]
      %v265 = vld [vmem:[%s217 + $0xbc] sm:$0x1]
      %v266 = vld [vmem:[%s217 + $0xc0] sm:$0xf]
      %v267 = vld [vmem:[%s217 + $0xc4] sm:$0xf]
      %v268 = vld [vmem:[%s217 + $0xc8] sm:$0x1]
      %v269 = vld [vmem:[%s217 + $0xcc] sm:$0xf]
      %v270 = vld [vmem:[%s217 + $0xd0] sm:$0xf]
      %v271 = vld [vmem:[%s217 + $0xd4] sm:$0x1]
      %v272 = vld [vmem:[%s1] sm:$0x3]
      %vm273 = vsmask.f32 3328
      %vm274 = vsmask.f32 7440
      %vm275 = vmor %vm273, %vm274
      %v277 = vshrl.u32 %v218, 16
      %v279 = vrot.slane %v277, 4
      %v280 = vshll.u32 %v218, 16
      %v282 = vrot.slane %v280, 5
      %v283 = vor.u32 %v279, %v282
      %v284 = vrot.slane %v283, 4
      %v286 = vshll.u32 %v219, 16
      %v288 = vrot.slane %v286, 5
      %v289 = vsel %vm275, %v284, %v288
      %v290 = vshrl.u32 %v219, 16
      %v292 = vrot.slane %v290, 4
      %v293 = vor.u32 %v292, %v288
      %v294 = vrot.slane %v293, 4
      %v296 = vshll.u32 %v220, 16
      %v298 = vrot.slane %v296, 5
      %v299 = vsel %vm275, %v294, %v298
      %v301 = vshrl.u32 %v221, 16
      %v303 = vrot.slane %v301, 4
      %v304 = vshll.u32 %v221, 16
      %v306 = vrot.slane %v304, 5
      %v307 = vor.u32 %v303, %v306
      %v308 = vrot.slane %v307, 4
      %v310 = vshll.u32 %v222, 16
      %v312 = vrot.slane %v310, 5
      %v313 = vsel %vm275, %v308, %v312
      %v314 = vshrl.u32 %v222, 16
      %v316 = vrot.slane %v314, 4
      %v317 = vor.u32 %v316, %v312
      %v318 = vrot.slane %v317, 4
      %v320 = vshll.u32 %v223, 16
      %v322 = vrot.slane %v320, 5
      %v323 = vsel %vm275, %v318, %v322
      %v325 = vshrl.u32 %v224, 16
      %v327 = vrot.slane %v325, 4
      %v328 = vshll.u32 %v224, 16
      %v330 = vrot.slane %v328, 5
      %v331 = vor.u32 %v327, %v330
      %v332 = vrot.slane %v331, 4
      %v334 = vshll.u32 %v225, 16
      %v336 = vrot.slane %v334, 5
      %v337 = vsel %vm275, %v332, %v336
      %v338 = vshrl.u32 %v225, 16
      %v340 = vrot.slane %v338, 4
      %v341 = vor.u32 %v340, %v336
      %v342 = vrot.slane %v341, 4
      %v344 = vshll.u32 %v226, 16
      %v346 = vrot.slane %v344, 5
      %v347 = vsel %vm275, %v342, %v346
      %v349 = vshrl.u32 %v227, 16
      %v351 = vrot.slane %v349, 4
      %v352 = vshll.u32 %v227, 16
      %v354 = vrot.slane %v352, 5
      %v355 = vor.u32 %v351, %v354
      %v356 = vrot.slane %v355, 4
      %v358 = vshll.u32 %v228, 16
      %v360 = vrot.slane %v358, 5
      %v361 = vsel %vm275, %v356, %v360
      %v362 = vshrl.u32 %v228, 16
      %v364 = vrot.slane %v362, 4
      %v365 = vor.u32 %v364, %v360
      %v366 = vrot.slane %v365, 4
      %v368 = vshll.u32 %v229, 16
      %v370 = vrot.slane %v368, 5
      %v371 = vsel %vm275, %v366, %v370
      %v373 = vshrl.u32 %v230, 16
      %v375 = vrot.slane %v373, 4
      %v376 = vshll.u32 %v230, 16
      %v378 = vrot.slane %v376, 5
      %v379 = vor.u32 %v375, %v378
      %v380 = vrot.slane %v379, 4
      %v382 = vshll.u32 %v231, 16
      %v384 = vrot.slane %v382, 5
      %v385 = vsel %vm275, %v380, %v384
      %v386 = vshrl.u32 %v231, 16
      %v388 = vrot.slane %v386, 4
      %v389 = vor.u32 %v388, %v384
      %v390 = vrot.slane %v389, 4
      %v392 = vshll.u32 %v232, 16
      %v394 = vrot.slane %v392, 5
      %v395 = vsel %vm275, %v390, %v394
      %v397 = vshrl.u32 %v233, 16
      %v399 = vrot.slane %v397, 4
      %v400 = vshll.u32 %v233, 16
      %v402 = vrot.slane %v400, 5
      %v403 = vor.u32 %v399, %v402
      %v404 = vrot.slane %v403, 4
      %v406 = vshll.u32 %v234, 16
      %v408 = vrot.slane %v406, 5
      %v409 = vsel %vm275, %v404, %v408
      %v410 = vshrl.u32 %v234, 16
      %v412 = vrot.slane %v410, 4
      %v413 = vor.u32 %v412, %v408
      %v414 = vrot.slane %v413, 4
      %v416 = vshll.u32 %v235, 16
      %v418 = vrot.slane %v416, 5
      %v419 = vsel %vm275, %v414, %v418
      %v421 = vshrl.u32 %v236, 16
      %v423 = vrot.slane %v421, 4
      %v424 = vshll.u32 %v236, 16
      %v426 = vrot.slane %v424, 5
      %v427 = vor.u32 %v423, %v426
      %v428 = vrot.slane %v427, 4
      %v430 = vshll.u32 %v237, 16
      %v432 = vrot.slane %v430, 5
      %v433 = vsel %vm275, %v428, %v432
      %v434 = vshrl.u32 %v237, 16
      %v436 = vrot.slane %v434, 4
      %v437 = vor.u32 %v436, %v432
      %v438 = vrot.slane %v437, 4
      %v440 = vshll.u32 %v238, 16
      %v442 = vrot.slane %v440, 5
      %v443 = vsel %vm275, %v438, %v442
      %v445 = vshrl.u32 %v239, 16
      %v447 = vrot.slane %v445, 4
      %v448 = vshll.u32 %v239, 16
      %v450 = vrot.slane %v448, 5
      %v451 = vor.u32 %v447, %v450
      %v452 = vrot.slane %v451, 4
      %v454 = vshll.u32 %v240, 16
      %v456 = vrot.slane %v454, 5
      %v457 = vsel %vm275, %v452, %v456
      %v458 = vshrl.u32 %v240, 16
      %v460 = vrot.slane %v458, 4
      %v461 = vor.u32 %v460, %v456
      %v462 = vrot.slane %v461, 4
      %v464 = vshll.u32 %v241, 16
      %v466 = vrot.slane %v464, 5
      %v467 = vsel %vm275, %v462, %v466
      %v469 = vshrl.u32 %v242, 16
      %v471 = vrot.slane %v469, 4
      %v472 = vshll.u32 %v242, 16
      %v474 = vrot.slane %v472, 5
      %v475 = vor.u32 %v471, %v474
      %v476 = vrot.slane %v475, 4
      %v478 = vshll.u32 %v243, 16
      %v480 = vrot.slane %v478, 5
      %v481 = vsel %vm275, %v476, %v480
      %v482 = vshrl.u32 %v243, 16
      %v484 = vrot.slane %v482, 4
      %v485 = vor.u32 %v484, %v480
      %v486 = vrot.slane %v485, 4
      %v488 = vshll.u32 %v244, 16
      %v490 = vrot.slane %v488, 5
      %v491 = vsel %vm275, %v486, %v490
      %v493 = vshrl.u32 %v245, 16
      %v495 = vrot.slane %v493, 4
      %v496 = vshll.u32 %v245, 16
      %v498 = vrot.slane %v496, 5
      %v499 = vor.u32 %v495, %v498
      %v500 = vrot.slane %v499, 4
      %v502 = vshll.u32 %v246, 16
      %v504 = vrot.slane %v502, 5
      %v505 = vsel %vm275, %v500, %v504
      %v506 = vshrl.u32 %v246, 16
      %v508 = vrot.slane %v506, 4
      %v509 = vor.u32 %v508, %v504
      %v510 = vrot.slane %v509, 4
      %v512 = vshll.u32 %v247, 16
      %v514 = vrot.slane %v512, 5
      %v515 = vsel %vm275, %v510, %v514
      %v517 = vshrl.u32 %v248, 16
      %v519 = vrot.slane %v517, 4
      %v520 = vshll.u32 %v248, 16
      %v522 = vrot.slane %v520, 5
      %v523 = vor.u32 %v519, %v522
      %v524 = vrot.slane %v523, 4
      %v526 = vshll.u32 %v249, 16
      %v528 = vrot.slane %v526, 5
      %v529 = vsel %vm275, %v524, %v528
      %v530 = vshrl.u32 %v249, 16
      %v532 = vrot.slane %v530, 4
      %v533 = vor.u32 %v532, %v528
      %v534 = vrot.slane %v533, 4
      %v536 = vshll.u32 %v250, 16
      %v538 = vrot.slane %v536, 5
      %v539 = vsel %vm275, %v534, %v538
      %v541 = vshrl.u32 %v251, 16
      %v543 = vrot.slane %v541, 4
      %v544 = vshll.u32 %v251, 16
      %v546 = vrot.slane %v544, 5
      %v547 = vor.u32 %v543, %v546
      %v548 = vrot.slane %v547, 4
      %v550 = vshll.u32 %v252, 16
      %v552 = vrot.slane %v550, 5
      %v553 = vsel %vm275, %v548, %v552
      %v554 = vshrl.u32 %v252, 16
      %v556 = vrot.slane %v554, 4
      %v557 = vor.u32 %v556, %v552
      %v558 = vrot.slane %v557, 4
      %v560 = vshll.u32 %v253, 16
      %v562 = vrot.slane %v560, 5
      %v563 = vsel %vm275, %v558, %v562
      %v565 = vshrl.u32 %v254, 16
      %v567 = vrot.slane %v565, 4
      %v568 = vshll.u32 %v254, 16
      %v570 = vrot.slane %v568, 5
      %v571 = vor.u32 %v567, %v570
      %v572 = vrot.slane %v571, 4
      %v574 = vshll.u32 %v255, 16
      %v576 = vrot.slane %v574, 5
      %v577 = vsel %vm275, %v572, %v576
      %v578 = vshrl.u32 %v255, 16
      %v580 = vrot.slane %v578, 4
      %v581 = vor.u32 %v580, %v576
      %v582 = vrot.slane %v581, 4
      %v584 = vshll.u32 %v256, 16
      %v586 = vrot.slane %v584, 5
      %v587 = vsel %vm275, %v582, %v586
      %v589 = vshrl.u32 %v257, 16
      %v591 = vrot.slane %v589, 4
      %v592 = vshll.u32 %v257, 16
      %v594 = vrot.slane %v592, 5
      %v595 = vor.u32 %v591, %v594
      %v596 = vrot.slane %v595, 4
      %v598 = vshll.u32 %v258, 16
      %v600 = vrot.slane %v598, 5
      %v601 = vsel %vm275, %v596, %v600
      %v602 = vshrl.u32 %v258, 16
      %v604 = vrot.slane %v602, 4
      %v605 = vor.u32 %v604, %v600
      %v606 = vrot.slane %v605, 4
      %v608 = vshll.u32 %v259, 16
      %v610 = vrot.slane %v608, 5
      %v611 = vsel %vm275, %v606, %v610
      %v613 = vshrl.u32 %v260, 16
      %v615 = vrot.slane %v613, 4
      %v616 = vshll.u32 %v260, 16
      %v618 = vrot.slane %v616, 5
      %v619 = vor.u32 %v615, %v618
      %v620 = vrot.slane %v619, 4
      %v622 = vshll.u32 %v261, 16
      %v624 = vrot.slane %v622, 5
      %v625 = vsel %vm275, %v620, %v624
      %v626 = vshrl.u32 %v261, 16
      %v628 = vrot.slane %v626, 4
      %v629 = vor.u32 %v628, %v624
      %v630 = vrot.slane %v629, 4
      %v632 = vshll.u32 %v262, 16
      %v634 = vrot.slane %v632, 5
      %v635 = vsel %vm275, %v630, %v634
      %v637 = vshrl.u32 %v263, 16
      %v639 = vrot.slane %v637, 4
      %v640 = vshll.u32 %v263, 16
      %v642 = vrot.slane %v640, 5
      %v643 = vor.u32 %v639, %v642
      %v644 = vrot.slane %v643, 4
      %v646 = vshll.u32 %v264, 16
      %v648 = vrot.slane %v646, 5
      %v649 = vsel %vm275, %v644, %v648
      %v650 = vshrl.u32 %v264, 16
      %v652 = vrot.slane %v650, 4
      %v653 = vor.u32 %v652, %v648
      %v654 = vrot.slane %v653, 4
      %v656 = vshll.u32 %v265, 16
      %v658 = vrot.slane %v656, 5
      %v659 = vsel %vm275, %v654, %v658
      %s660 = scalar_lea.vmem %s1, 2
      %v661 = vld [vmem:[%s660] sm:$0x3]
      %v662 = vunpack.c.l.b16 %v289
      %v663 = vunpack.c.l.b16 %v299
      %v664 = vunpack.c.l.b16 %v313
      %v665 = vunpack.c.l.b16 %v323
      %v666 = vunpack.c.l.b16 %v337
      %v667 = vunpack.c.l.b16 %v347
      %v668 = vunpack.c.l.b16 %v361
      %v669 = vunpack.c.l.b16 %v371
      %v670 = vunpack.c.l.b16 %v385
      %v671 = vunpack.c.l.b16 %v395
      %v672 = vunpack.c.l.b16 %v409
      %v673 = vunpack.c.l.b16 %v419
      %v674 = vunpack.c.l.b16 %v433
      %v675 = vunpack.c.l.b16 %v443
      %v676 = vunpack.c.l.b16 %v457
      %v677 = vunpack.c.l.b16 %v467
      %v678 = vunpack.c.l.b16 %v481
      %v679 = vunpack.c.l.b16 %v491
      %v680 = vunpack.c.l.b16 %v505
      %v681 = vunpack.c.l.b16 %v515
      %v682 = vunpack.c.l.b16 %v529
      %v683 = vunpack.c.l.b16 %v539
      %v684 = vunpack.c.l.b16 %v553
      %v685 = vunpack.c.l.b16 %v563
      %v686 = vunpack.c.l.b16 %v577
      %v687 = vunpack.c.l.b16 %v587
      %v688 = vunpack.c.l.b16 %v601
      %v689 = vunpack.c.l.b16 %v611
      %v690 = vunpack.c.l.b16 %v625
      %v691 = vunpack.c.l.b16 %v635
      %v692 = vunpack.c.l.b16 %v649
      %v693 = vunpack.c.l.b16 %v659
      %v694 = vpack.c.b16 %v663, %v662
      %v695 = vpack.c.b16 %v665, %v664
      %v696 = vpack.c.b16 %v667, %v666
      %v697 = vpack.c.b16 %v669, %v668
      %v698 = vpack.c.b16 %v671, %v670
      %v699 = vpack.c.b16 %v673, %v672
      %v700 = vpack.c.b16 %v675, %v674
      %v701 = vpack.c.b16 %v677, %v676
      %v702 = vpack.c.b16 %v679, %v678
      %v703 = vpack.c.b16 %v681, %v680
      %v704 = vpack.c.b16 %v683, %v682
      %v705 = vpack.c.b16 %v685, %v684
      %v706 = vpack.c.b16 %v687, %v686
      %v707 = vpack.c.b16 %v689, %v688
      %v708 = vpack.c.b16 %v691, %v690
      %v709 = vpack.c.b16 %v693, %v692
      %vm710 = vcmask 31744
      %v712 = vsel %vm710, %v694, 0
      %v715 = vsel %vm710, %v695, 0
      %v718 = vsel %vm710, %v696, 0
      %v721 = vsel %vm710, %v697, 0
      %v724 = vsel %vm710, %v698, 0
      %v727 = vsel %vm710, %v699, 0
      %v730 = vsel %vm710, %v700, 0
      %v733 = vsel %vm710, %v701, 0
      %v736 = vsel %vm710, %v702, 0
      %v739 = vsel %vm710, %v703, 0
      %v742 = vsel %vm710, %v704, 0
      %v745 = vsel %vm710, %v705, 0
      %v748 = vsel %vm710, %v706, 0
      %v751 = vsel %vm710, %v707, 0
      %v754 = vsel %vm710, %v708, 0
      %v757 = vsel %vm710, %v709, 0
      %vm759 = vcmask 1041408
      %v761 = vsel %vm759, %v661, 0
      %763 = vmatpush.bf16.msra.mxu0 0
      %764 = vmatpush.bf16.msra.mxu0 0
      %765 = vmatpush.bf16.msra.mxu0 0
      %766 = vmatpush.bf16.msra.mxu0 0
      %767 = vmatpush.bf16.msra.mxu0 0
      %768 = vmatpush.bf16.msra.mxu0 0
      %769 = vmatpush.bf16.msra.mxu0 0
      %770 = vmatpush.bf16.msra.mxu0 %v761
      %771 = vmatmul.bf16.gmra.mxu0 %v712
      %v772 = vpop.f32.mrf.mxu0
      %v773 = vadd.f32 0.0, %v772
      %v774 = vpop.f32.mrf.mxu0
      %v775 = vadd.f32 0.0, %v774
      %776 = vmatmul.bf16.gmra.mxu0 %v715
      %v777 = vpop.f32.mrf.mxu0
      %v778 = vadd.f32 0.0, %v777
      %v779 = vpop.f32.mrf.mxu0
      %v780 = vadd.f32 0.0, %v779
      %781 = vmatmul.bf16.gmra.mxu0 %v718
      %v782 = vpop.f32.mrf.mxu0
      %v783 = vadd.f32 0.0, %v782
      %v784 = vpop.f32.mrf.mxu0
      %v785 = vadd.f32 0.0, %v784
      %786 = vmatmul.bf16.gmra.mxu0 %v721
      %v787 = vpop.f32.mrf.mxu0
      %v788 = vadd.f32 0.0, %v787
      %v789 = vpop.f32.mrf.mxu0
      %v790 = vadd.f32 0.0, %v789
      %791 = vmatmul.bf16.gmra.mxu0 %v724
      %v792 = vpop.f32.mrf.mxu0
      %v793 = vadd.f32 0.0, %v792
      %v794 = vpop.f32.mrf.mxu0
      %v795 = vadd.f32 0.0, %v794
      %796 = vmatmul.bf16.gmra.mxu0 %v727
      %v797 = vpop.f32.mrf.mxu0
      %v798 = vadd.f32 0.0, %v797
      %v799 = vpop.f32.mrf.mxu0
      %v800 = vadd.f32 0.0, %v799
      %801 = vmatmul.bf16.gmra.mxu0 %v730
      %v802 = vpop.f32.mrf.mxu0
      %v803 = vadd.f32 0.0, %v802
      %v804 = vpop.f32.mrf.mxu0
      %v805 = vadd.f32 0.0, %v804
      %806 = vmatmul.bf16.gmra.mxu0 %v733
      %v807 = vpop.f32.mrf.mxu0
      %v808 = vadd.f32 0.0, %v807
      %v809 = vpop.f32.mrf.mxu0
      %v810 = vadd.f32 0.0, %v809
      %811 = vmatmul.bf16.gmra.mxu0 %v736
      %v812 = vpop.f32.mrf.mxu0
      %v813 = vadd.f32 0.0, %v812
      %v814 = vpop.f32.mrf.mxu0
      %v815 = vadd.f32 0.0, %v814
      %816 = vmatmul.bf16.gmra.mxu0 %v739
      %v817 = vpop.f32.mrf.mxu0
      %v818 = vadd.f32 0.0, %v817
      %v819 = vpop.f32.mrf.mxu0
      %v820 = vadd.f32 0.0, %v819
      %821 = vmatmul.bf16.gmra.mxu0 %v742
      %v822 = vpop.f32.mrf.mxu0
      %v823 = vadd.f32 0.0, %v822
      %v824 = vpop.f32.mrf.mxu0
      %v825 = vadd.f32 0.0, %v824
      %826 = vmatmul.bf16.gmra.mxu0 %v745
      %v827 = vpop.f32.mrf.mxu0
      %v828 = vadd.f32 0.0, %v827
      %v829 = vpop.f32.mrf.mxu0
      %v830 = vadd.f32 0.0, %v829
      %831 = vmatmul.bf16.gmra.mxu0 %v748
      %v832 = vpop.f32.mrf.mxu0
      %v833 = vadd.f32 0.0, %v832
      %v834 = vpop.f32.mrf.mxu0
      %v835 = vadd.f32 0.0, %v834
      %836 = vmatmul.bf16.gmra.mxu0 %v751
      %v837 = vpop.f32.mrf.mxu0
      %v838 = vadd.f32 0.0, %v837
      %v839 = vpop.f32.mrf.mxu0
      %v840 = vadd.f32 0.0, %v839
      %841 = vmatmul.bf16.gmra.mxu0 %v754
      %v842 = vpop.f32.mrf.mxu0
      %v843 = vadd.f32 0.0, %v842
      %v844 = vpop.f32.mrf.mxu0
      %v845 = vadd.f32 0.0, %v844
      %846 = vmatmul.bf16.gmra.mxu0 %v757
      %v847 = vpop.f32.mrf.mxu0
      %v848 = vadd.f32 0.0, %v847
      %v849 = vpop.f32.mrf.mxu0
      %v850 = vadd.f32 0.0, %v849
      %851 = vdwg.mxu0
      %v884 = vunpack.c.l.b16 %v218
      %v885 = vunpack.c.l.b16 %v219
      %v886 = vunpack.c.l.b16 %v221
      %v887 = vunpack.c.l.b16 %v222
      %v888 = vunpack.c.l.b16 %v224
      %v889 = vunpack.c.l.b16 %v225
      %v890 = vunpack.c.l.b16 %v227
      %v891 = vunpack.c.l.b16 %v228
      %v892 = vunpack.c.l.b16 %v230
      %v893 = vunpack.c.l.b16 %v231
      %v894 = vunpack.c.l.b16 %v233
      %v895 = vunpack.c.l.b16 %v234
      %v896 = vunpack.c.l.b16 %v236
      %v897 = vunpack.c.l.b16 %v237
      %v898 = vunpack.c.l.b16 %v239
      %v899 = vunpack.c.l.b16 %v240
      %v900 = vunpack.c.l.b16 %v242
      %v901 = vunpack.c.l.b16 %v243
      %v902 = vunpack.c.l.b16 %v245
      %v903 = vunpack.c.l.b16 %v246
      %v904 = vunpack.c.l.b16 %v248
      %v905 = vunpack.c.l.b16 %v249
      %v906 = vunpack.c.l.b16 %v251
      %v907 = vunpack.c.l.b16 %v252
      %v908 = vunpack.c.l.b16 %v254
      %v909 = vunpack.c.l.b16 %v255
      %v910 = vunpack.c.l.b16 %v257
      %v911 = vunpack.c.l.b16 %v258
      %v912 = vunpack.c.l.b16 %v260
      %v913 = vunpack.c.l.b16 %v261
      %v914 = vunpack.c.l.b16 %v263
      %v915 = vunpack.c.l.b16 %v264
      %v916 = vpack.c.b16 %v885, %v884
      %v917 = vpack.c.b16 %v887, %v886
      %v918 = vpack.c.b16 %v889, %v888
      %v919 = vpack.c.b16 %v891, %v890
      %v920 = vpack.c.b16 %v893, %v892
      %v921 = vpack.c.b16 %v895, %v894
      %v922 = vpack.c.b16 %v897, %v896
      %v923 = vpack.c.b16 %v899, %v898
      %v924 = vpack.c.b16 %v901, %v900
      %v925 = vpack.c.b16 %v903, %v902
      %v926 = vpack.c.b16 %v905, %v904
      %v927 = vpack.c.b16 %v907, %v906
      %v928 = vpack.c.b16 %v909, %v908
      %v929 = vpack.c.b16 %v911, %v910
      %v930 = vpack.c.b16 %v913, %v912
      %v931 = vpack.c.b16 %v915, %v914
      %v933 = vsel %vm710, %v916, 0
      %v936 = vsel %vm710, %v917, 0
      %v939 = vsel %vm710, %v918, 0
      %v942 = vsel %vm710, %v919, 0
      %v945 = vsel %vm710, %v920, 0
      %v948 = vsel %vm710, %v921, 0
      %v951 = vsel %vm710, %v922, 0
      %v954 = vsel %vm710, %v923, 0
      %v957 = vsel %vm710, %v924, 0
      %v960 = vsel %vm710, %v925, 0
      %v963 = vsel %vm710, %v926, 0
      %v966 = vsel %vm710, %v927, 0
      %v969 = vsel %vm710, %v928, 0
      %v972 = vsel %vm710, %v929, 0
      %v975 = vsel %vm710, %v930, 0
      %v978 = vsel %vm710, %v931, 0
      %v981 = vsel %vm759, %v272, 0
      %983 = vmatpush.bf16.msra.mxu0 0
      %984 = vmatpush.bf16.msra.mxu0 0
      %985 = vmatpush.bf16.msra.mxu0 0
      %986 = vmatpush.bf16.msra.mxu0 0
      %987 = vmatpush.bf16.msra.mxu0 0
      %988 = vmatpush.bf16.msra.mxu0 0
      %989 = vmatpush.bf16.msra.mxu0 0
      %990 = vmatpush.bf16.msra.mxu0 %v981
      %991 = vmatmul.bf16.gmra.mxu0 %v933
      %v992 = vpop.f32.mrf.mxu0
      %v993 = vadd.f32 %v773, %v992
      %v994 = vpop.f32.mrf.mxu0
      %v995 = vadd.f32 %v775, %v994
      %996 = vmatmul.bf16.gmra.mxu0 %v936
      %v997 = vpop.f32.mrf.mxu0
      %v998 = vadd.f32 %v778, %v997
      %v999 = vpop.f32.mrf.mxu0
      %v1000 = vadd.f32 %v780, %v999
      %1001 = vmatmul.bf16.gmra.mxu0 %v939
      %v1002 = vpop.f32.mrf.mxu0
      %v1003 = vadd.f32 %v783, %v1002
      %v1004 = vpop.f32.mrf.mxu0
      %v1005 = vadd.f32 %v785, %v1004
      %1006 = vmatmul.bf16.gmra.mxu0 %v942
      %v1007 = vpop.f32.mrf.mxu0
      %v1008 = vadd.f32 %v788, %v1007
      %v1009 = vpop.f32.mrf.mxu0
      %v1010 = vadd.f32 %v790, %v1009
      %1011 = vmatmul.bf16.gmra.mxu0 %v945
      %v1012 = vpop.f32.mrf.mxu0
      %v1013 = vadd.f32 %v793, %v1012
      %v1014 = vpop.f32.mrf.mxu0
      %v1015 = vadd.f32 %v795, %v1014
      %1016 = vmatmul.bf16.gmra.mxu0 %v948
      %v1017 = vpop.f32.mrf.mxu0
      %v1018 = vadd.f32 %v798, %v1017
      %v1019 = vpop.f32.mrf.mxu0
      %v1020 = vadd.f32 %v800, %v1019
      %1021 = vmatmul.bf16.gmra.mxu0 %v951
      %v1022 = vpop.f32.mrf.mxu0
      %v1023 = vadd.f32 %v803, %v1022
      %v1024 = vpop.f32.mrf.mxu0
      %v1025 = vadd.f32 %v805, %v1024
      %1026 = vmatmul.bf16.gmra.mxu0 %v954
      %v1027 = vpop.f32.mrf.mxu0
      %v1028 = vadd.f32 %v808, %v1027
      %v1029 = vpop.f32.mrf.mxu0
      %v1030 = vadd.f32 %v810, %v1029
      %1031 = vmatmul.bf16.gmra.mxu0 %v957
      %v1032 = vpop.f32.mrf.mxu0
      %v1033 = vadd.f32 %v813, %v1032
      %v1034 = vpop.f32.mrf.mxu0
      %v1035 = vadd.f32 %v815, %v1034
      %1036 = vmatmul.bf16.gmra.mxu0 %v960
      %v1037 = vpop.f32.mrf.mxu0
      %v1038 = vadd.f32 %v818, %v1037
      %v1039 = vpop.f32.mrf.mxu0
      %v1040 = vadd.f32 %v820, %v1039
      %1041 = vmatmul.bf16.gmra.mxu0 %v963
      %v1042 = vpop.f32.mrf.mxu0
      %v1043 = vadd.f32 %v823, %v1042
      %v1044 = vpop.f32.mrf.mxu0
      %v1045 = vadd.f32 %v825, %v1044
      %1046 = vmatmul.bf16.gmra.mxu0 %v966
      %v1047 = vpop.f32.mrf.mxu0
      %v1048 = vadd.f32 %v828, %v1047
      %v1049 = vpop.f32.mrf.mxu0
      %v1050 = vadd.f32 %v830, %v1049
      %1051 = vmatmul.bf16.gmra.mxu0 %v969
      %v1052 = vpop.f32.mrf.mxu0
      %v1053 = vadd.f32 %v833, %v1052
      %v1054 = vpop.f32.mrf.mxu0
      %v1055 = vadd.f32 %v835, %v1054
      %1056 = vmatmul.bf16.gmra.mxu0 %v972
      %v1057 = vpop.f32.mrf.mxu0
      %v1058 = vadd.f32 %v838, %v1057
      %v1059 = vpop.f32.mrf.mxu0
      %v1060 = vadd.f32 %v840, %v1059
      %1061 = vmatmul.bf16.gmra.mxu0 %v975
      %v1062 = vpop.f32.mrf.mxu0
      %v1063 = vadd.f32 %v843, %v1062
      %v1064 = vpop.f32.mrf.mxu0
      %v1065 = vadd.f32 %v845, %v1064
      %1066 = vmatmul.bf16.gmra.mxu0 %v978
      %v1067 = vpop.f32.mrf.mxu0
      %v1068 = vadd.f32 %v848, %v1067
      %v1069 = vpop.f32.mrf.mxu0
      %v1070 = vadd.f32 %v850, %v1069
      %1071 = vdwg.mxu0
      %vm1088 = vcmask 1042432
      %vm1089 = vcmask 1046532
      %vm1090 = vmor %vm1088, %vm1089
      %v1091 = vrot.slane %v218, 5
      %v1092 = vrot.slane %v1091, 4
      %v1093 = vrot.slane %v219, 5
      %v1094 = vsel %vm1090, %v1092, %v1093
      %v1095 = vrot.slane %v1093, 4
      %v1096 = vrot.slane %v220, 5
      %v1097 = vsel %vm1090, %v1095, %v1096
      %v1098 = vrot.slane %v221, 5
      %v1099 = vrot.slane %v1098, 4
      %v1100 = vrot.slane %v222, 5
      %v1101 = vsel %vm1090, %v1099, %v1100
      %v1102 = vrot.slane %v1100, 4
      %v1103 = vrot.slane %v223, 5
      %v1104 = vsel %vm1090, %v1102, %v1103
      %v1105 = vrot.slane %v224, 5
      %v1106 = vrot.slane %v1105, 4
      %v1107 = vrot.slane %v225, 5
      %v1108 = vsel %vm1090, %v1106, %v1107
      %v1109 = vrot.slane %v1107, 4
      %v1110 = vrot.slane %v226, 5
      %v1111 = vsel %vm1090, %v1109, %v1110
      %v1112 = vrot.slane %v227, 5
      %v1113 = vrot.slane %v1112, 4
      %v1114 = vrot.slane %v228, 5
      %v1115 = vsel %vm1090, %v1113, %v1114
      %v1116 = vrot.slane %v1114, 4
      %v1117 = vrot.slane %v229, 5
      %v1118 = vsel %vm1090, %v1116, %v1117
      %v1119 = vrot.slane %v230, 5
      %v1120 = vrot.slane %v1119, 4
      %v1121 = vrot.slane %v231, 5
      %v1122 = vsel %vm1090, %v1120, %v1121
      %v1123 = vrot.slane %v1121, 4
      %v1124 = vrot.slane %v232, 5
      %v1125 = vsel %vm1090, %v1123, %v1124
      %v1126 = vrot.slane %v233, 5
      %v1127 = vrot.slane %v1126, 4
      %v1128 = vrot.slane %v234, 5
      %v1129 = vsel %vm1090, %v1127, %v1128
      %v1130 = vrot.slane %v1128, 4
      %v1131 = vrot.slane %v235, 5
      %v1132 = vsel %vm1090, %v1130, %v1131
      %v1133 = vrot.slane %v236, 5
      %v1134 = vrot.slane %v1133, 4
      %v1135 = vrot.slane %v237, 5
      %v1136 = vsel %vm1090, %v1134, %v1135
      %v1137 = vrot.slane %v1135, 4
      %v1138 = vrot.slane %v238, 5
      %v1139 = vsel %vm1090, %v1137, %v1138
      %v1140 = vrot.slane %v239, 5
      %v1141 = vrot.slane %v1140, 4
      %v1142 = vrot.slane %v240, 5
      %v1143 = vsel %vm1090, %v1141, %v1142
      %v1144 = vrot.slane %v1142, 4
      %v1145 = vrot.slane %v241, 5
      %v1146 = vsel %vm1090, %v1144, %v1145
      %v1147 = vrot.slane %v242, 5
      %v1148 = vrot.slane %v1147, 4
      %v1149 = vrot.slane %v243, 5
      %v1150 = vsel %vm1090, %v1148, %v1149
      %v1151 = vrot.slane %v1149, 4
      %v1152 = vrot.slane %v244, 5
      %v1153 = vsel %vm1090, %v1151, %v1152
      %v1154 = vrot.slane %v245, 5
      %v1155 = vrot.slane %v1154, 4
      %v1156 = vrot.slane %v246, 5
      %v1157 = vsel %vm1090, %v1155, %v1156
      %v1158 = vrot.slane %v1156, 4
      %v1159 = vrot.slane %v247, 5
      %v1160 = vsel %vm1090, %v1158, %v1159
      %v1161 = vrot.slane %v248, 5
      %v1162 = vrot.slane %v1161, 4
      %v1163 = vrot.slane %v249, 5
      %v1164 = vsel %vm1090, %v1162, %v1163
      %v1165 = vrot.slane %v1163, 4
      %v1166 = vrot.slane %v250, 5
      %v1167 = vsel %vm1090, %v1165, %v1166
      %v1168 = vrot.slane %v251, 5
      %v1169 = vrot.slane %v1168, 4
      %v1170 = vrot.slane %v252, 5
      %v1171 = vsel %vm1090, %v1169, %v1170
      %v1172 = vrot.slane %v1170, 4
      %v1173 = vrot.slane %v253, 5
      %v1174 = vsel %vm1090, %v1172, %v1173
      %v1175 = vrot.slane %v254, 5
      %v1176 = vrot.slane %v1175, 4
      %v1177 = vrot.slane %v255, 5
      %v1178 = vsel %vm1090, %v1176, %v1177
      %v1179 = vrot.slane %v1177, 4
      %v1180 = vrot.slane %v256, 5
      %v1181 = vsel %vm1090, %v1179, %v1180
      %v1182 = vrot.slane %v257, 5
      %v1183 = vrot.slane %v1182, 4
      %v1184 = vrot.slane %v258, 5
      %v1185 = vsel %vm1090, %v1183, %v1184
      %v1186 = vrot.slane %v1184, 4
      %v1187 = vrot.slane %v259, 5
      %v1188 = vsel %vm1090, %v1186, %v1187
      %v1189 = vrot.slane %v260, 5
      %v1190 = vrot.slane %v1189, 4
      %v1191 = vrot.slane %v261, 5
      %v1192 = vsel %vm1090, %v1190, %v1191
      %v1193 = vrot.slane %v1191, 4
      %v1194 = vrot.slane %v262, 5
      %v1195 = vsel %vm1090, %v1193, %v1194
      %v1196 = vrot.slane %v263, 5
      %v1197 = vrot.slane %v1196, 4
      %v1198 = vrot.slane %v264, 5
      %v1199 = vsel %vm1090, %v1197, %v1198
      %v1200 = vrot.slane %v1198, 4
      %v1201 = vrot.slane %v265, 5
      %v1202 = vsel %vm1090, %v1200, %v1201
      %s1203 = scalar_lea.vmem %s1, 4
      %v1204 = vld [vmem:[%s1203] sm:$0x3]
      %v1205 = vunpack.c.l.b16 %v1094
      %v1206 = vunpack.c.l.b16 %v1097
      %v1207 = vunpack.c.l.b16 %v1101
      %v1208 = vunpack.c.l.b16 %v1104
      %v1209 = vunpack.c.l.b16 %v1108
      %v1210 = vunpack.c.l.b16 %v1111
      %v1211 = vunpack.c.l.b16 %v1115
      %v1212 = vunpack.c.l.b16 %v1118
      %v1213 = vunpack.c.l.b16 %v1122
      %v1214 = vunpack.c.l.b16 %v1125
      %v1215 = vunpack.c.l.b16 %v1129
      %v1216 = vunpack.c.l.b16 %v1132
      %v1217 = vunpack.c.l.b16 %v1136
      %v1218 = vunpack.c.l.b16 %v1139
      %v1219 = vunpack.c.l.b16 %v1143
      %v1220 = vunpack.c.l.b16 %v1146
      %v1221 = vunpack.c.l.b16 %v1150
      %v1222 = vunpack.c.l.b16 %v1153
      %v1223 = vunpack.c.l.b16 %v1157
      %v1224 = vunpack.c.l.b16 %v1160
      %v1225 = vunpack.c.l.b16 %v1164
      %v1226 = vunpack.c.l.b16 %v1167
      %v1227 = vunpack.c.l.b16 %v1171
      %v1228 = vunpack.c.l.b16 %v1174
      %v1229 = vunpack.c.l.b16 %v1178
      %v1230 = vunpack.c.l.b16 %v1181
      %v1231 = vunpack.c.l.b16 %v1185
      %v1232 = vunpack.c.l.b16 %v1188
      %v1233 = vunpack.c.l.b16 %v1192
      %v1234 = vunpack.c.l.b16 %v1195
      %v1235 = vunpack.c.l.b16 %v1199
      %v1236 = vunpack.c.l.b16 %v1202
      %v1237 = vpack.c.b16 %v1206, %v1205
      %v1238 = vpack.c.b16 %v1208, %v1207
      %v1239 = vpack.c.b16 %v1210, %v1209
      %v1240 = vpack.c.b16 %v1212, %v1211
      %v1241 = vpack.c.b16 %v1214, %v1213
      %v1242 = vpack.c.b16 %v1216, %v1215
      %v1243 = vpack.c.b16 %v1218, %v1217
      %v1244 = vpack.c.b16 %v1220, %v1219
      %v1245 = vpack.c.b16 %v1222, %v1221
      %v1246 = vpack.c.b16 %v1224, %v1223
      %v1247 = vpack.c.b16 %v1226, %v1225
      %v1248 = vpack.c.b16 %v1228, %v1227
      %v1249 = vpack.c.b16 %v1230, %v1229
      %v1250 = vpack.c.b16 %v1232, %v1231
      %v1251 = vpack.c.b16 %v1234, %v1233
      %v1252 = vpack.c.b16 %v1236, %v1235
      %v1254 = vsel %vm710, %v1237, 0
      %v1257 = vsel %vm710, %v1238, 0
      %v1260 = vsel %vm710, %v1239, 0
      %v1263 = vsel %vm710, %v1240, 0
      %v1266 = vsel %vm710, %v1241, 0
      %v1269 = vsel %vm710, %v1242, 0
      %v1272 = vsel %vm710, %v1243, 0
      %v1275 = vsel %vm710, %v1244, 0
      %v1278 = vsel %vm710, %v1245, 0
      %v1281 = vsel %vm710, %v1246, 0
      %v1284 = vsel %vm710, %v1247, 0
      %v1287 = vsel %vm710, %v1248, 0
      %v1290 = vsel %vm710, %v1249, 0
      %v1293 = vsel %vm710, %v1250, 0
      %v1296 = vsel %vm710, %v1251, 0
      %v1299 = vsel %vm710, %v1252, 0
      %v1302 = vsel %vm759, %v1204, 0
      %1304 = vmatpush.bf16.msra.mxu0 0
      %1305 = vmatpush.bf16.msra.mxu0 0
      %1306 = vmatpush.bf16.msra.mxu0 0
      %1307 = vmatpush.bf16.msra.mxu0 0
      %1308 = vmatpush.bf16.msra.mxu0 0
      %1309 = vmatpush.bf16.msra.mxu0 0
      %1310 = vmatpush.bf16.msra.mxu0 0
      %1311 = vmatpush.bf16.msra.mxu0 %v1302
      %1312 = vmatmul.bf16.gmra.mxu0 %v1254
      %v1313 = vpop.f32.mrf.mxu0
      %v1314 = vadd.f32 0.0, %v1313
      %v1315 = vpop.f32.mrf.mxu0
      %v1316 = vadd.f32 0.0, %v1315
      %1317 = vmatmul.bf16.gmra.mxu0 %v1257
      %v1318 = vpop.f32.mrf.mxu0
      %v1319 = vadd.f32 0.0, %v1318
      %v1320 = vpop.f32.mrf.mxu0
      %v1321 = vadd.f32 0.0, %v1320
      %1322 = vmatmul.bf16.gmra.mxu0 %v1260
      %v1323 = vpop.f32.mrf.mxu0
      %v1324 = vadd.f32 0.0, %v1323
      %v1325 = vpop.f32.mrf.mxu0
      %v1326 = vadd.f32 0.0, %v1325
      %1327 = vmatmul.bf16.gmra.mxu0 %v1263
      %v1328 = vpop.f32.mrf.mxu0
      %v1329 = vadd.f32 0.0, %v1328
      %v1330 = vpop.f32.mrf.mxu0
      %v1331 = vadd.f32 0.0, %v1330
      %1332 = vmatmul.bf16.gmra.mxu0 %v1266
      %v1333 = vpop.f32.mrf.mxu0
      %v1334 = vadd.f32 0.0, %v1333
      %v1335 = vpop.f32.mrf.mxu0
      %v1336 = vadd.f32 0.0, %v1335
      %1337 = vmatmul.bf16.gmra.mxu0 %v1269
      %v1338 = vpop.f32.mrf.mxu0
      %v1339 = vadd.f32 0.0, %v1338
      %v1340 = vpop.f32.mrf.mxu0
      %v1341 = vadd.f32 0.0, %v1340
      %1342 = vmatmul.bf16.gmra.mxu0 %v1272
      %v1343 = vpop.f32.mrf.mxu0
      %v1344 = vadd.f32 0.0, %v1343
      %v1345 = vpop.f32.mrf.mxu0
      %v1346 = vadd.f32 0.0, %v1345
      %1347 = vmatmul.bf16.gmra.mxu0 %v1275
      %v1348 = vpop.f32.mrf.mxu0
      %v1349 = vadd.f32 0.0, %v1348
      %v1350 = vpop.f32.mrf.mxu0
      %v1351 = vadd.f32 0.0, %v1350
      %1352 = vmatmul.bf16.gmra.mxu0 %v1278
      %v1353 = vpop.f32.mrf.mxu0
      %v1354 = vadd.f32 0.0, %v1353
      %v1355 = vpop.f32.mrf.mxu0
      %v1356 = vadd.f32 0.0, %v1355
      %1357 = vmatmul.bf16.gmra.mxu0 %v1281
      %v1358 = vpop.f32.mrf.mxu0
      %v1359 = vadd.f32 0.0, %v1358
      %v1360 = vpop.f32.mrf.mxu0
      %v1361 = vadd.f32 0.0, %v1360
      %1362 = vmatmul.bf16.gmra.mxu0 %v1284
      %v1363 = vpop.f32.mrf.mxu0
      %v1364 = vadd.f32 0.0, %v1363
      %v1365 = vpop.f32.mrf.mxu0
      %v1366 = vadd.f32 0.0, %v1365
      %1367 = vmatmul.bf16.gmra.mxu0 %v1287
      %v1368 = vpop.f32.mrf.mxu0
      %v1369 = vadd.f32 0.0, %v1368
      %v1370 = vpop.f32.mrf.mxu0
      %v1371 = vadd.f32 0.0, %v1370
      %1372 = vmatmul.bf16.gmra.mxu0 %v1290
      %v1373 = vpop.f32.mrf.mxu0
      %v1374 = vadd.f32 0.0, %v1373
      %v1375 = vpop.f32.mrf.mxu0
      %v1376 = vadd.f32 0.0, %v1375
      %1377 = vmatmul.bf16.gmra.mxu0 %v1293
      %v1378 = vpop.f32.mrf.mxu0
      %v1379 = vadd.f32 0.0, %v1378
      %v1380 = vpop.f32.mrf.mxu0
      %v1381 = vadd.f32 0.0, %v1380
      %1382 = vmatmul.bf16.gmra.mxu0 %v1296
      %v1383 = vpop.f32.mrf.mxu0
      %v1384 = vadd.f32 0.0, %v1383
      %v1385 = vpop.f32.mrf.mxu0
      %v1386 = vadd.f32 0.0, %v1385
      %1387 = vmatmul.bf16.gmra.mxu0 %v1299
      %v1388 = vpop.f32.mrf.mxu0
      %v1389 = vadd.f32 0.0, %v1388
      %v1390 = vpop.f32.mrf.mxu0
      %v1391 = vadd.f32 0.0, %v1390
      %1392 = vdwg.mxu0
      %v1393 = vadd.f32 %v993, %v1314
      %v1394 = vadd.f32 %v995, %v1316
      %v1395 = vadd.f32 %v998, %v1319
      %v1396 = vadd.f32 %v1000, %v1321
      %v1397 = vadd.f32 %v1003, %v1324
      %v1398 = vadd.f32 %v1005, %v1326
      %v1399 = vadd.f32 %v1008, %v1329
      %v1400 = vadd.f32 %v1010, %v1331
      %v1401 = vadd.f32 %v1013, %v1334
      %v1402 = vadd.f32 %v1015, %v1336
      %v1403 = vadd.f32 %v1018, %v1339
      %v1404 = vadd.f32 %v1020, %v1341
      %v1405 = vadd.f32 %v1023, %v1344
      %v1406 = vadd.f32 %v1025, %v1346
      %v1407 = vadd.f32 %v1028, %v1349
      %v1408 = vadd.f32 %v1030, %v1351
      %v1409 = vadd.f32 %v1033, %v1354
      %v1410 = vadd.f32 %v1035, %v1356
      %v1411 = vadd.f32 %v1038, %v1359
      %v1412 = vadd.f32 %v1040, %v1361
      %v1413 = vadd.f32 %v1043, %v1364
      %v1414 = vadd.f32 %v1045, %v1366
      %v1415 = vadd.f32 %v1048, %v1369
      %v1416 = vadd.f32 %v1050, %v1371
      %v1417 = vadd.f32 %v1053, %v1374
      %v1418 = vadd.f32 %v1055, %v1376
      %v1419 = vadd.f32 %v1058, %v1379
      %v1420 = vadd.f32 %v1060, %v1381
      %v1421 = vadd.f32 %v1063, %v1384
      %v1422 = vadd.f32 %v1065, %v1386
      %v1423 = vadd.f32 %v1068, %v1389
      %v1424 = vadd.f32 %v1070, %v1391
      %s1425 = scalar_lea.vmem %s1, 6
      %v1426 = vld [vmem:[%s1425] sm:$0x3]
      %v1429 = vunpack.c.l.b16 %v266
      %v1430 = vunpack.c.l.b16 %v267
      %v1431 = vpack.c.b16 %v1430, %v1429
      %v1433 = vsel %vm710, %v1431, 0
      %v1436 = vsel %vm759, %v1426, 0
      %1438 = vmatpush.bf16.msra.mxu0 0
      %1439 = vmatpush.bf16.msra.mxu0 0
      %1440 = vmatpush.bf16.msra.mxu0 0
      %1441 = vmatpush.bf16.msra.mxu0 0
      %1442 = vmatpush.bf16.msra.mxu0 0
      %1443 = vmatpush.bf16.msra.mxu0 0
      %1444 = vmatpush.bf16.msra.mxu0 0
      %1445 = vmatpush.bf16.msra.mxu0 %v1436
      %1446 = vmatmul.bf16.gmra.mxu0 %v936
      %v1447 = vpop.f32.mrf.mxu0
      %v1448 = vadd.f32 0.0, %v1447
      %v1449 = vpop.f32.mrf.mxu0
      %v1450 = vadd.f32 0.0, %v1449
      %1451 = vmatmul.bf16.gmra.mxu0 %v939
      %v1452 = vpop.f32.mrf.mxu0
      %v1453 = vadd.f32 0.0, %v1452
      %v1454 = vpop.f32.mrf.mxu0
      %v1455 = vadd.f32 0.0, %v1454
      %1456 = vmatmul.bf16.gmra.mxu0 %v942
      %v1457 = vpop.f32.mrf.mxu0
      %v1458 = vadd.f32 0.0, %v1457
      %v1459 = vpop.f32.mrf.mxu0
      %v1460 = vadd.f32 0.0, %v1459
      %1461 = vmatmul.bf16.gmra.mxu0 %v945
      %v1462 = vpop.f32.mrf.mxu0
      %v1463 = vadd.f32 0.0, %v1462
      %v1464 = vpop.f32.mrf.mxu0
      %v1465 = vadd.f32 0.0, %v1464
      %1466 = vmatmul.bf16.gmra.mxu0 %v948
      %v1467 = vpop.f32.mrf.mxu0
      %v1468 = vadd.f32 0.0, %v1467
      %v1469 = vpop.f32.mrf.mxu0
      %v1470 = vadd.f32 0.0, %v1469
      %1471 = vmatmul.bf16.gmra.mxu0 %v951
      %v1472 = vpop.f32.mrf.mxu0
      %v1473 = vadd.f32 0.0, %v1472
      %v1474 = vpop.f32.mrf.mxu0
      %v1475 = vadd.f32 0.0, %v1474
      %1476 = vmatmul.bf16.gmra.mxu0 %v954
      %v1477 = vpop.f32.mrf.mxu0
      %v1478 = vadd.f32 0.0, %v1477
      %v1479 = vpop.f32.mrf.mxu0
      %v1480 = vadd.f32 0.0, %v1479
      %1481 = vmatmul.bf16.gmra.mxu0 %v957
      %v1482 = vpop.f32.mrf.mxu0
      %v1483 = vadd.f32 0.0, %v1482
      %v1484 = vpop.f32.mrf.mxu0
      %v1485 = vadd.f32 0.0, %v1484
      %1486 = vmatmul.bf16.gmra.mxu0 %v960
      %v1487 = vpop.f32.mrf.mxu0
      %v1488 = vadd.f32 0.0, %v1487
      %v1489 = vpop.f32.mrf.mxu0
      %v1490 = vadd.f32 0.0, %v1489
      %1491 = vmatmul.bf16.gmra.mxu0 %v963
      %v1492 = vpop.f32.mrf.mxu0
      %v1493 = vadd.f32 0.0, %v1492
      %v1494 = vpop.f32.mrf.mxu0
      %v1495 = vadd.f32 0.0, %v1494
      %1496 = vmatmul.bf16.gmra.mxu0 %v966
      %v1497 = vpop.f32.mrf.mxu0
      %v1498 = vadd.f32 0.0, %v1497
      %v1499 = vpop.f32.mrf.mxu0
      %v1500 = vadd.f32 0.0, %v1499
      %1501 = vmatmul.bf16.gmra.mxu0 %v969
      %v1502 = vpop.f32.mrf.mxu0
      %v1503 = vadd.f32 0.0, %v1502
      %v1504 = vpop.f32.mrf.mxu0
      %v1505 = vadd.f32 0.0, %v1504
      %1506 = vmatmul.bf16.gmra.mxu0 %v972
      %v1507 = vpop.f32.mrf.mxu0
      %v1508 = vadd.f32 0.0, %v1507
      %v1509 = vpop.f32.mrf.mxu0
      %v1510 = vadd.f32 0.0, %v1509
      %1511 = vmatmul.bf16.gmra.mxu0 %v975
      %v1512 = vpop.f32.mrf.mxu0
      %v1513 = vadd.f32 0.0, %v1512
      %v1514 = vpop.f32.mrf.mxu0
      %v1515 = vadd.f32 0.0, %v1514
      %1516 = vmatmul.bf16.gmra.mxu0 %v978
      %v1517 = vpop.f32.mrf.mxu0
      %v1518 = vadd.f32 0.0, %v1517
      %v1519 = vpop.f32.mrf.mxu0
      %v1520 = vadd.f32 0.0, %v1519
      %1521 = vmatmul.bf16.gmra.mxu0 %v1433
      %v1522 = vpop.f32.mrf.mxu0
      %v1523 = vadd.f32 0.0, %v1522
      %v1524 = vpop.f32.mrf.mxu0
      %v1525 = vadd.f32 0.0, %v1524
      %1526 = vdwg.mxu0
      %v1527 = vadd.f32 %v1393, %v1448
      %v1528 = vadd.f32 %v1394, %v1450
      %v1529 = vadd.f32 %v1395, %v1453
      %v1530 = vadd.f32 %v1396, %v1455
      %v1531 = vadd.f32 %v1397, %v1458
      %v1532 = vadd.f32 %v1398, %v1460
      %v1533 = vadd.f32 %v1399, %v1463
      %v1534 = vadd.f32 %v1400, %v1465
      %v1535 = vadd.f32 %v1401, %v1468
      %v1536 = vadd.f32 %v1402, %v1470
      %v1537 = vadd.f32 %v1403, %v1473
      %v1538 = vadd.f32 %v1404, %v1475
      %v1539 = vadd.f32 %v1405, %v1478
      %v1540 = vadd.f32 %v1406, %v1480
      %v1541 = vadd.f32 %v1407, %v1483
      %v1542 = vadd.f32 %v1408, %v1485
      %v1543 = vadd.f32 %v1409, %v1488
      %v1544 = vadd.f32 %v1410, %v1490
      %v1545 = vadd.f32 %v1411, %v1493
      %v1546 = vadd.f32 %v1412, %v1495
      %v1547 = vadd.f32 %v1413, %v1498
      %v1548 = vadd.f32 %v1414, %v1500
      %v1549 = vadd.f32 %v1415, %v1503
      %v1550 = vadd.f32 %v1416, %v1505
      %v1551 = vadd.f32 %v1417, %v1508
      %v1552 = vadd.f32 %v1418, %v1510
      %v1553 = vadd.f32 %v1419, %v1513
      %v1554 = vadd.f32 %v1420, %v1515
      %v1555 = vadd.f32 %v1421, %v1518
      %v1556 = vadd.f32 %v1422, %v1520
      %v1557 = vadd.f32 %v1423, %v1523
      %v1558 = vadd.f32 %v1424, %v1525
      %v1560 = vshrl.u32 %v266, 16
      %v1562 = vrot.slane %v1560, 4
      %v1563 = vshll.u32 %v266, 16
      %v1565 = vrot.slane %v1563, 5
      %v1566 = vor.u32 %v1562, %v1565
      %v1567 = vrot.slane %v1566, 4
      %v1569 = vshll.u32 %v267, 16
      %v1571 = vrot.slane %v1569, 5
      %v1572 = vsel %vm275, %v1567, %v1571
      %v1573 = vshrl.u32 %v267, 16
      %v1575 = vrot.slane %v1573, 4
      %v1576 = vor.u32 %v1575, %v1571
      %v1577 = vrot.slane %v1576, 4
      %v1579 = vshll.u32 %v268, 16
      %v1581 = vrot.slane %v1579, 5
      %v1582 = vsel %vm275, %v1577, %v1581
      %s1583 = scalar_lea.vmem %s1, 8
      %v1584 = vld [vmem:[%s1583] sm:$0x3]
      %v1585 = vunpack.c.l.b16 %v1572
      %v1586 = vunpack.c.l.b16 %v1582
      %v1587 = vpack.c.b16 %v1586, %v1585
      %v1589 = vsel %vm710, %v1587, 0
      %v1592 = vsel %vm759, %v1584, 0
      %1594 = vmatpush.bf16.msra.mxu0 0
      %1595 = vmatpush.bf16.msra.mxu0 0
      %1596 = vmatpush.bf16.msra.mxu0 0
      %1597 = vmatpush.bf16.msra.mxu0 0
      %1598 = vmatpush.bf16.msra.mxu0 0
      %1599 = vmatpush.bf16.msra.mxu0 0
      %1600 = vmatpush.bf16.msra.mxu0 0
      %1601 = vmatpush.bf16.msra.mxu0 %v1592
      %1602 = vmatmul.bf16.gmra.mxu0 %v715
      %v1603 = vpop.f32.mrf.mxu0
      %v1604 = vadd.f32 0.0, %v1603
      %v1605 = vpop.f32.mrf.mxu0
      %v1606 = vadd.f32 0.0, %v1605
      %1607 = vmatmul.bf16.gmra.mxu0 %v718
      %v1608 = vpop.f32.mrf.mxu0
      %v1609 = vadd.f32 0.0, %v1608
      %v1610 = vpop.f32.mrf.mxu0
      %v1611 = vadd.f32 0.0, %v1610
      %1612 = vmatmul.bf16.gmra.mxu0 %v721
      %v1613 = vpop.f32.mrf.mxu0
      %v1614 = vadd.f32 0.0, %v1613
      %v1615 = vpop.f32.mrf.mxu0
      %v1616 = vadd.f32 0.0, %v1615
      %1617 = vmatmul.bf16.gmra.mxu0 %v724
      %v1618 = vpop.f32.mrf.mxu0
      %v1619 = vadd.f32 0.0, %v1618
      %v1620 = vpop.f32.mrf.mxu0
      %v1621 = vadd.f32 0.0, %v1620
      %1622 = vmatmul.bf16.gmra.mxu0 %v727
      %v1623 = vpop.f32.mrf.mxu0
      %v1624 = vadd.f32 0.0, %v1623
      %v1625 = vpop.f32.mrf.mxu0
      %v1626 = vadd.f32 0.0, %v1625
      %1627 = vmatmul.bf16.gmra.mxu0 %v730
      %v1628 = vpop.f32.mrf.mxu0
      %v1629 = vadd.f32 0.0, %v1628
      %v1630 = vpop.f32.mrf.mxu0
      %v1631 = vadd.f32 0.0, %v1630
      %1632 = vmatmul.bf16.gmra.mxu0 %v733
      %v1633 = vpop.f32.mrf.mxu0
      %v1634 = vadd.f32 0.0, %v1633
      %v1635 = vpop.f32.mrf.mxu0
      %v1636 = vadd.f32 0.0, %v1635
      %1637 = vmatmul.bf16.gmra.mxu0 %v736
      %v1638 = vpop.f32.mrf.mxu0
      %v1639 = vadd.f32 0.0, %v1638
      %v1640 = vpop.f32.mrf.mxu0
      %v1641 = vadd.f32 0.0, %v1640
      %1642 = vmatmul.bf16.gmra.mxu0 %v739
      %v1643 = vpop.f32.mrf.mxu0
      %v1644 = vadd.f32 0.0, %v1643
      %v1645 = vpop.f32.mrf.mxu0
      %v1646 = vadd.f32 0.0, %v1645
      %1647 = vmatmul.bf16.gmra.mxu0 %v742
      %v1648 = vpop.f32.mrf.mxu0
      %v1649 = vadd.f32 0.0, %v1648
      %v1650 = vpop.f32.mrf.mxu0
      %v1651 = vadd.f32 0.0, %v1650
      %1652 = vmatmul.bf16.gmra.mxu0 %v745
      %v1653 = vpop.f32.mrf.mxu0
      %v1654 = vadd.f32 0.0, %v1653
      %v1655 = vpop.f32.mrf.mxu0
      %v1656 = vadd.f32 0.0, %v1655
      %1657 = vmatmul.bf16.gmra.mxu0 %v748
      %v1658 = vpop.f32.mrf.mxu0
      %v1659 = vadd.f32 0.0, %v1658
      %v1660 = vpop.f32.mrf.mxu0
      %v1661 = vadd.f32 0.0, %v1660
      %1662 = vmatmul.bf16.gmra.mxu0 %v751
      %v1663 = vpop.f32.mrf.mxu0
      %v1664 = vadd.f32 0.0, %v1663
      %v1665 = vpop.f32.mrf.mxu0
      %v1666 = vadd.f32 0.0, %v1665
      %1667 = vmatmul.bf16.gmra.mxu0 %v754
      %v1668 = vpop.f32.mrf.mxu0
      %v1669 = vadd.f32 0.0, %v1668
      %v1670 = vpop.f32.mrf.mxu0
      %v1671 = vadd.f32 0.0, %v1670
      %1672 = vmatmul.bf16.gmra.mxu0 %v757
      %v1673 = vpop.f32.mrf.mxu0
      %v1674 = vadd.f32 0.0, %v1673
      %v1675 = vpop.f32.mrf.mxu0
      %v1676 = vadd.f32 0.0, %v1675
      %1677 = vmatmul.bf16.gmra.mxu0 %v1589
      %v1678 = vpop.f32.mrf.mxu0
      %v1679 = vadd.f32 0.0, %v1678
      %v1680 = vpop.f32.mrf.mxu0
      %v1681 = vadd.f32 0.0, %v1680
      %1682 = vdwg.mxu0
      %v1683 = vadd.f32 %v1527, %v1604
      %v1684 = vadd.f32 %v1528, %v1606
      %v1685 = vadd.f32 %v1529, %v1609
      %v1686 = vadd.f32 %v1530, %v1611
      %v1687 = vadd.f32 %v1531, %v1614
      %v1688 = vadd.f32 %v1532, %v1616
      %v1689 = vadd.f32 %v1533, %v1619
      %v1690 = vadd.f32 %v1534, %v1621
      %v1691 = vadd.f32 %v1535, %v1624
      %v1692 = vadd.f32 %v1536, %v1626
      %v1693 = vadd.f32 %v1537, %v1629
      %v1694 = vadd.f32 %v1538, %v1631
      %v1695 = vadd.f32 %v1539, %v1634
      %v1696 = vadd.f32 %v1540, %v1636
      %v1697 = vadd.f32 %v1541, %v1639
      %v1698 = vadd.f32 %v1542, %v1641
      %v1699 = vadd.f32 %v1543, %v1644
      %v1700 = vadd.f32 %v1544, %v1646
      %v1701 = vadd.f32 %v1545, %v1649
      %v1702 = vadd.f32 %v1546, %v1651
      %v1703 = vadd.f32 %v1547, %v1654
      %v1704 = vadd.f32 %v1548, %v1656
      %v1705 = vadd.f32 %v1549, %v1659
      %v1706 = vadd.f32 %v1550, %v1661
      %v1707 = vadd.f32 %v1551, %v1664
      %v1708 = vadd.f32 %v1552, %v1666
      %v1709 = vadd.f32 %v1553, %v1669
      %v1710 = vadd.f32 %v1554, %v1671
      %v1711 = vadd.f32 %v1555, %v1674
      %v1712 = vadd.f32 %v1556, %v1676
      %v1713 = vadd.f32 %v1557, %v1679
      %v1714 = vadd.f32 %v1558, %v1681
      %v1716 = vrot.slane %v266, 5
      %v1717 = vrot.slane %v1716, 4
      %v1718 = vrot.slane %v267, 5
      %v1719 = vsel %vm1090, %v1717, %v1718
      %v1720 = vrot.slane %v1718, 4
      %v1721 = vrot.slane %v268, 5
      %v1722 = vsel %vm1090, %v1720, %v1721
      %s1723 = scalar_lea.vmem %s1, 10
      %v1724 = vld [vmem:[%s1723] sm:$0x3]
      %v1725 = vunpack.c.l.b16 %v1719
      %v1726 = vunpack.c.l.b16 %v1722
      %v1727 = vpack.c.b16 %v1726, %v1725
      %v1729 = vsel %vm710, %v1727, 0
      %v1732 = vsel %vm759, %v1724, 0
      %1734 = vmatpush.bf16.msra.mxu0 0
      %1735 = vmatpush.bf16.msra.mxu0 0
      %1736 = vmatpush.bf16.msra.mxu0 0
      %1737 = vmatpush.bf16.msra.mxu0 0
      %1738 = vmatpush.bf16.msra.mxu0 0
      %1739 = vmatpush.bf16.msra.mxu0 0
      %1740 = vmatpush.bf16.msra.mxu0 0
      %1741 = vmatpush.bf16.msra.mxu0 %v1732
      %1742 = vmatmul.bf16.gmra.mxu0 %v1257
      %v1743 = vpop.f32.mrf.mxu0
      %v1744 = vadd.f32 0.0, %v1743
      %v1745 = vpop.f32.mrf.mxu0
      %v1746 = vadd.f32 0.0, %v1745
      %1747 = vmatmul.bf16.gmra.mxu0 %v1260
      %v1748 = vpop.f32.mrf.mxu0
      %v1749 = vadd.f32 0.0, %v1748
      %v1750 = vpop.f32.mrf.mxu0
      %v1751 = vadd.f32 0.0, %v1750
      %1752 = vmatmul.bf16.gmra.mxu0 %v1263
      %v1753 = vpop.f32.mrf.mxu0
      %v1754 = vadd.f32 0.0, %v1753
      %v1755 = vpop.f32.mrf.mxu0
      %v1756 = vadd.f32 0.0, %v1755
      %1757 = vmatmul.bf16.gmra.mxu0 %v1266
      %v1758 = vpop.f32.mrf.mxu0
      %v1759 = vadd.f32 0.0, %v1758
      %v1760 = vpop.f32.mrf.mxu0
      %v1761 = vadd.f32 0.0, %v1760
      %1762 = vmatmul.bf16.gmra.mxu0 %v1269
      %v1763 = vpop.f32.mrf.mxu0
      %v1764 = vadd.f32 0.0, %v1763
      %v1765 = vpop.f32.mrf.mxu0
      %v1766 = vadd.f32 0.0, %v1765
      %1767 = vmatmul.bf16.gmra.mxu0 %v1272
      %v1768 = vpop.f32.mrf.mxu0
      %v1769 = vadd.f32 0.0, %v1768
      %v1770 = vpop.f32.mrf.mxu0
      %v1771 = vadd.f32 0.0, %v1770
      %1772 = vmatmul.bf16.gmra.mxu0 %v1275
      %v1773 = vpop.f32.mrf.mxu0
      %v1774 = vadd.f32 0.0, %v1773
      %v1775 = vpop.f32.mrf.mxu0
      %v1776 = vadd.f32 0.0, %v1775
      %1777 = vmatmul.bf16.gmra.mxu0 %v1278
      %v1778 = vpop.f32.mrf.mxu0
      %v1779 = vadd.f32 0.0, %v1778
      %v1780 = vpop.f32.mrf.mxu0
      %v1781 = vadd.f32 0.0, %v1780
      %1782 = vmatmul.bf16.gmra.mxu0 %v1281
      %v1783 = vpop.f32.mrf.mxu0
      %v1784 = vadd.f32 0.0, %v1783
      %v1785 = vpop.f32.mrf.mxu0
      %v1786 = vadd.f32 0.0, %v1785
      %1787 = vmatmul.bf16.gmra.mxu0 %v1284
      %v1788 = vpop.f32.mrf.mxu0
      %v1789 = vadd.f32 0.0, %v1788
      %v1790 = vpop.f32.mrf.mxu0
      %v1791 = vadd.f32 0.0, %v1790
      %1792 = vmatmul.bf16.gmra.mxu0 %v1287
      %v1793 = vpop.f32.mrf.mxu0
      %v1794 = vadd.f32 0.0, %v1793
      %v1795 = vpop.f32.mrf.mxu0
      %v1796 = vadd.f32 0.0, %v1795
      %1797 = vmatmul.bf16.gmra.mxu0 %v1290
      %v1798 = vpop.f32.mrf.mxu0
      %v1799 = vadd.f32 0.0, %v1798
      %v1800 = vpop.f32.mrf.mxu0
      %v1801 = vadd.f32 0.0, %v1800
      %1802 = vmatmul.bf16.gmra.mxu0 %v1293
      %v1803 = vpop.f32.mrf.mxu0
      %v1804 = vadd.f32 0.0, %v1803
      %v1805 = vpop.f32.mrf.mxu0
      %v1806 = vadd.f32 0.0, %v1805
      %1807 = vmatmul.bf16.gmra.mxu0 %v1296
      %v1808 = vpop.f32.mrf.mxu0
      %v1809 = vadd.f32 0.0, %v1808
      %v1810 = vpop.f32.mrf.mxu0
      %v1811 = vadd.f32 0.0, %v1810
      %1812 = vmatmul.bf16.gmra.mxu0 %v1299
      %v1813 = vpop.f32.mrf.mxu0
      %v1814 = vadd.f32 0.0, %v1813
      %v1815 = vpop.f32.mrf.mxu0
      %v1816 = vadd.f32 0.0, %v1815
      %1817 = vmatmul.bf16.gmra.mxu0 %v1729
      %v1818 = vpop.f32.mrf.mxu0
      %v1819 = vadd.f32 0.0, %v1818
      %v1820 = vpop.f32.mrf.mxu0
      %v1821 = vadd.f32 0.0, %v1820
      %1822 = vdwg.mxu0
      %v1823 = vadd.f32 %v1683, %v1744
      %v1824 = vadd.f32 %v1684, %v1746
      %v1825 = vadd.f32 %v1685, %v1749
      %v1826 = vadd.f32 %v1686, %v1751
      %v1827 = vadd.f32 %v1687, %v1754
      %v1828 = vadd.f32 %v1688, %v1756
      %v1829 = vadd.f32 %v1689, %v1759
      %v1830 = vadd.f32 %v1690, %v1761
      %v1831 = vadd.f32 %v1691, %v1764
      %v1832 = vadd.f32 %v1692, %v1766
      %v1833 = vadd.f32 %v1693, %v1769
      %v1834 = vadd.f32 %v1694, %v1771
      %v1835 = vadd.f32 %v1695, %v1774
      %v1836 = vadd.f32 %v1696, %v1776
      %v1837 = vadd.f32 %v1697, %v1779
      %v1838 = vadd.f32 %v1698, %v1781
      %v1839 = vadd.f32 %v1699, %v1784
      %v1840 = vadd.f32 %v1700, %v1786
      %v1841 = vadd.f32 %v1701, %v1789
      %v1842 = vadd.f32 %v1702, %v1791
      %v1843 = vadd.f32 %v1703, %v1794
      %v1844 = vadd.f32 %v1704, %v1796
      %v1845 = vadd.f32 %v1705, %v1799
      %v1846 = vadd.f32 %v1706, %v1801
      %v1847 = vadd.f32 %v1707, %v1804
      %v1848 = vadd.f32 %v1708, %v1806
      %v1849 = vadd.f32 %v1709, %v1809
      %v1850 = vadd.f32 %v1710, %v1811
      %v1851 = vadd.f32 %v1711, %v1814
      %v1852 = vadd.f32 %v1712, %v1816
      %v1853 = vadd.f32 %v1713, %v1819
      %v1854 = vadd.f32 %v1714, %v1821
      %s1855 = scalar_lea.vmem %s1, 12
      %v1856 = vld [vmem:[%s1855] sm:$0x3]
      %v1859 = vunpack.c.l.b16 %v269
      %v1860 = vunpack.c.l.b16 %v270
      %v1861 = vpack.c.b16 %v1860, %v1859
      %v1863 = vsel %vm710, %v1861, 0
      %v1866 = vsel %vm759, %v1856, 0
      %1868 = vmatpush.bf16.msra.mxu0 0
      %1869 = vmatpush.bf16.msra.mxu0 0
      %1870 = vmatpush.bf16.msra.mxu0 0
      %1871 = vmatpush.bf16.msra.mxu0 0
      %1872 = vmatpush.bf16.msra.mxu0 0
      %1873 = vmatpush.bf16.msra.mxu0 0
      %1874 = vmatpush.bf16.msra.mxu0 0
      %1875 = vmatpush.bf16.msra.mxu0 %v1866
      %1876 = vmatmul.bf16.gmra.mxu0 %v939
      %v1877 = vpop.f32.mrf.mxu0
      %v1878 = vadd.f32 0.0, %v1877
      %v1879 = vpop.f32.mrf.mxu0
      %v1880 = vadd.f32 0.0, %v1879
      %1881 = vmatmul.bf16.gmra.mxu0 %v942
      %v1882 = vpop.f32.mrf.mxu0
      %v1883 = vadd.f32 0.0, %v1882
      %v1884 = vpop.f32.mrf.mxu0
      %v1885 = vadd.f32 0.0, %v1884
      %1886 = vmatmul.bf16.gmra.mxu0 %v945
      %v1887 = vpop.f32.mrf.mxu0
      %v1888 = vadd.f32 0.0, %v1887
      %v1889 = vpop.f32.mrf.mxu0
      %v1890 = vadd.f32 0.0, %v1889
      %1891 = vmatmul.bf16.gmra.mxu0 %v948
      %v1892 = vpop.f32.mrf.mxu0
      %v1893 = vadd.f32 0.0, %v1892
      %v1894 = vpop.f32.mrf.mxu0
      %v1895 = vadd.f32 0.0, %v1894
      %1896 = vmatmul.bf16.gmra.mxu0 %v951
      %v1897 = vpop.f32.mrf.mxu0
      %v1898 = vadd.f32 0.0, %v1897
      %v1899 = vpop.f32.mrf.mxu0
      %v1900 = vadd.f32 0.0, %v1899
      %1901 = vmatmul.bf16.gmra.mxu0 %v954
      %v1902 = vpop.f32.mrf.mxu0
      %v1903 = vadd.f32 0.0, %v1902
      %v1904 = vpop.f32.mrf.mxu0
      %v1905 = vadd.f32 0.0, %v1904
      %1906 = vmatmul.bf16.gmra.mxu0 %v957
      %v1907 = vpop.f32.mrf.mxu0
      %v1908 = vadd.f32 0.0, %v1907
      %v1909 = vpop.f32.mrf.mxu0
      %v1910 = vadd.f32 0.0, %v1909
      %1911 = vmatmul.bf16.gmra.mxu0 %v960
      %v1912 = vpop.f32.mrf.mxu0
      %v1913 = vadd.f32 0.0, %v1912
      %v1914 = vpop.f32.mrf.mxu0
      %v1915 = vadd.f32 0.0, %v1914
      %1916 = vmatmul.bf16.gmra.mxu0 %v963
      %v1917 = vpop.f32.mrf.mxu0
      %v1918 = vadd.f32 0.0, %v1917
      %v1919 = vpop.f32.mrf.mxu0
      %v1920 = vadd.f32 0.0, %v1919
      %1921 = vmatmul.bf16.gmra.mxu0 %v966
      %v1922 = vpop.f32.mrf.mxu0
      %v1923 = vadd.f32 0.0, %v1922
      %v1924 = vpop.f32.mrf.mxu0
      %v1925 = vadd.f32 0.0, %v1924
      %1926 = vmatmul.bf16.gmra.mxu0 %v969
      %v1927 = vpop.f32.mrf.mxu0
      %v1928 = vadd.f32 0.0, %v1927
      %v1929 = vpop.f32.mrf.mxu0
      %v1930 = vadd.f32 0.0, %v1929
      %1931 = vmatmul.bf16.gmra.mxu0 %v972
      %v1932 = vpop.f32.mrf.mxu0
      %v1933 = vadd.f32 0.0, %v1932
      %v1934 = vpop.f32.mrf.mxu0
      %v1935 = vadd.f32 0.0, %v1934
      %1936 = vmatmul.bf16.gmra.mxu0 %v975
      %v1937 = vpop.f32.mrf.mxu0
      %v1938 = vadd.f32 0.0, %v1937
      %v1939 = vpop.f32.mrf.mxu0
      %v1940 = vadd.f32 0.0, %v1939
      %1941 = vmatmul.bf16.gmra.mxu0 %v978
      %v1942 = vpop.f32.mrf.mxu0
      %v1943 = vadd.f32 0.0, %v1942
      %v1944 = vpop.f32.mrf.mxu0
      %v1945 = vadd.f32 0.0, %v1944
      %1946 = vmatmul.bf16.gmra.mxu0 %v1433
      %v1947 = vpop.f32.mrf.mxu0
      %v1948 = vadd.f32 0.0, %v1947
      %v1949 = vpop.f32.mrf.mxu0
      %v1950 = vadd.f32 0.0, %v1949
      %1951 = vmatmul.bf16.gmra.mxu0 %v1863
      %v1952 = vpop.f32.mrf.mxu0
      %v1953 = vadd.f32 0.0, %v1952
      %v1954 = vpop.f32.mrf.mxu0
      %v1955 = vadd.f32 0.0, %v1954
      %1956 = vdwg.mxu0
      %v1957 = vadd.f32 %v1823, %v1878
      %v1958 = vadd.f32 %v1824, %v1880
      %v1959 = vadd.f32 %v1825, %v1883
      %v1960 = vadd.f32 %v1826, %v1885
      %v1961 = vadd.f32 %v1827, %v1888
      %v1962 = vadd.f32 %v1828, %v1890
      %v1963 = vadd.f32 %v1829, %v1893
      %v1964 = vadd.f32 %v1830, %v1895
      %v1965 = vadd.f32 %v1831, %v1898
      %v1966 = vadd.f32 %v1832, %v1900
      %v1967 = vadd.f32 %v1833, %v1903
      %v1968 = vadd.f32 %v1834, %v1905
      %v1969 = vadd.f32 %v1835, %v1908
      %v1970 = vadd.f32 %v1836, %v1910
      %v1971 = vadd.f32 %v1837, %v1913
      %v1972 = vadd.f32 %v1838, %v1915
      %v1973 = vadd.f32 %v1839, %v1918
      %v1974 = vadd.f32 %v1840, %v1920
      %v1975 = vadd.f32 %v1841, %v1923
      %v1976 = vadd.f32 %v1842, %v1925
      %v1977 = vadd.f32 %v1843, %v1928
      %v1978 = vadd.f32 %v1844, %v1930
      %v1979 = vadd.f32 %v1845, %v1933
      %v1980 = vadd.f32 %v1846, %v1935
      %v1981 = vadd.f32 %v1847, %v1938
      %v1982 = vadd.f32 %v1848, %v1940
      %v1983 = vadd.f32 %v1849, %v1943
      %v1984 = vadd.f32 %v1850, %v1945
      %v1985 = vadd.f32 %v1851, %v1948
      %v1986 = vadd.f32 %v1852, %v1950
      %v1987 = vadd.f32 %v1853, %v1953
      %v1988 = vadd.f32 %v1854, %v1955
      %v1990 = vshrl.u32 %v269, 16
      %v1992 = vrot.slane %v1990, 4
      %v1993 = vshll.u32 %v269, 16
      %v1995 = vrot.slane %v1993, 5
      %v1996 = vor.u32 %v1992, %v1995
      %v1997 = vrot.slane %v1996, 4
      %v1999 = vshll.u32 %v270, 16
      %v2001 = vrot.slane %v1999, 5
      %v2002 = vsel %vm275, %v1997, %v2001
      %v2003 = vshrl.u32 %v270, 16
      %v2005 = vrot.slane %v2003, 4
      %v2006 = vor.u32 %v2005, %v2001
      %v2007 = vrot.slane %v2006, 4
      %v2009 = vshll.u32 %v271, 16
      %v2011 = vrot.slane %v2009, 5
      %v2012 = vsel %vm275, %v2007, %v2011
      %s2013 = scalar_lea.vmem %s1, 14
      %v2014 = vld [vmem:[%s2013] sm:$0x3]
      %v2015 = vunpack.c.l.b16 %v2002
      %v2016 = vunpack.c.l.b16 %v2012
      %v2017 = vpack.c.b16 %v2016, %v2015
      %v2019 = vsel %vm710, %v2017, 0
      %v2022 = vsel %vm759, %v2014, 0
      %2024 = vmatpush.bf16.msra.mxu0 0
      %2025 = vmatpush.bf16.msra.mxu0 0
      %2026 = vmatpush.bf16.msra.mxu0 0
      %2027 = vmatpush.bf16.msra.mxu0 0
      %2028 = vmatpush.bf16.msra.mxu0 0
      %2029 = vmatpush.bf16.msra.mxu0 0
      %2030 = vmatpush.bf16.msra.mxu0 0
      %2031 = vmatpush.bf16.msra.mxu0 %v2022
      %2032 = vmatmul.bf16.gmra.mxu0 %v718
      %v2033 = vpop.f32.mrf.mxu0
      %v2034 = vadd.f32 0.0, %v2033
      %v2035 = vpop.f32.mrf.mxu0
      %v2036 = vadd.f32 0.0, %v2035
      %2037 = vmatmul.bf16.gmra.mxu0 %v721
      %v2038 = vpop.f32.mrf.mxu0
      %v2039 = vadd.f32 0.0, %v2038
      %v2040 = vpop.f32.mrf.mxu0
      %v2041 = vadd.f32 0.0, %v2040
      %2042 = vmatmul.bf16.gmra.mxu0 %v724
      %v2043 = vpop.f32.mrf.mxu0
      %v2044 = vadd.f32 0.0, %v2043
      %v2045 = vpop.f32.mrf.mxu0
      %v2046 = vadd.f32 0.0, %v2045
      %2047 = vmatmul.bf16.gmra.mxu0 %v727
      %v2048 = vpop.f32.mrf.mxu0
      %v2049 = vadd.f32 0.0, %v2048
      %v2050 = vpop.f32.mrf.mxu0
      %v2051 = vadd.f32 0.0, %v2050
      %2052 = vmatmul.bf16.gmra.mxu0 %v730
      %v2053 = vpop.f32.mrf.mxu0
      %v2054 = vadd.f32 0.0, %v2053
      %v2055 = vpop.f32.mrf.mxu0
      %v2056 = vadd.f32 0.0, %v2055
      %2057 = vmatmul.bf16.gmra.mxu0 %v733
      %v2058 = vpop.f32.mrf.mxu0
      %v2059 = vadd.f32 0.0, %v2058
      %v2060 = vpop.f32.mrf.mxu0
      %v2061 = vadd.f32 0.0, %v2060
      %2062 = vmatmul.bf16.gmra.mxu0 %v736
      %v2063 = vpop.f32.mrf.mxu0
      %v2064 = vadd.f32 0.0, %v2063
      %v2065 = vpop.f32.mrf.mxu0
      %v2066 = vadd.f32 0.0, %v2065
      %2067 = vmatmul.bf16.gmra.mxu0 %v739
      %v2068 = vpop.f32.mrf.mxu0
      %v2069 = vadd.f32 0.0, %v2068
      %v2070 = vpop.f32.mrf.mxu0
      %v2071 = vadd.f32 0.0, %v2070
      %2072 = vmatmul.bf16.gmra.mxu0 %v742
      %v2073 = vpop.f32.mrf.mxu0
      %v2074 = vadd.f32 0.0, %v2073
      %v2075 = vpop.f32.mrf.mxu0
      %v2076 = vadd.f32 0.0, %v2075
      %2077 = vmatmul.bf16.gmra.mxu0 %v745
      %v2078 = vpop.f32.mrf.mxu0
      %v2079 = vadd.f32 0.0, %v2078
      %v2080 = vpop.f32.mrf.mxu0
      %v2081 = vadd.f32 0.0, %v2080
      %2082 = vmatmul.bf16.gmra.mxu0 %v748
      %v2083 = vpop.f32.mrf.mxu0
      %v2084 = vadd.f32 0.0, %v2083
      %v2085 = vpop.f32.mrf.mxu0
      %v2086 = vadd.f32 0.0, %v2085
      %2087 = vmatmul.bf16.gmra.mxu0 %v751
      %v2088 = vpop.f32.mrf.mxu0
      %v2089 = vadd.f32 0.0, %v2088
      %v2090 = vpop.f32.mrf.mxu0
      %v2091 = vadd.f32 0.0, %v2090
      %2092 = vmatmul.bf16.gmra.mxu0 %v754
      %v2093 = vpop.f32.mrf.mxu0
      %v2094 = vadd.f32 0.0, %v2093
      %v2095 = vpop.f32.mrf.mxu0
      %v2096 = vadd.f32 0.0, %v2095
      %2097 = vmatmul.bf16.gmra.mxu0 %v757
      %v2098 = vpop.f32.mrf.mxu0
      %v2099 = vadd.f32 0.0, %v2098
      %v2100 = vpop.f32.mrf.mxu0
      %v2101 = vadd.f32 0.0, %v2100
      %2102 = vmatmul.bf16.gmra.mxu0 %v1589
      %v2103 = vpop.f32.mrf.mxu0
      %v2104 = vadd.f32 0.0, %v2103
      %v2105 = vpop.f32.mrf.mxu0
      %v2106 = vadd.f32 0.0, %v2105
      %2107 = vmatmul.bf16.gmra.mxu0 %v2019
      %v2108 = vpop.f32.mrf.mxu0
      %v2109 = vadd.f32 0.0, %v2108
      %v2110 = vpop.f32.mrf.mxu0
      %v2111 = vadd.f32 0.0, %v2110
      %2112 = vdwg.mxu0
      %v2113 = vadd.f32 %v1957, %v2034
      %v2114 = vadd.f32 %v1958, %v2036
      %v2115 = vadd.f32 %v1959, %v2039
      %v2116 = vadd.f32 %v1960, %v2041
      %v2117 = vadd.f32 %v1961, %v2044
      %v2118 = vadd.f32 %v1962, %v2046
      %v2119 = vadd.f32 %v1963, %v2049
      %v2120 = vadd.f32 %v1964, %v2051
      %v2121 = vadd.f32 %v1965, %v2054
      %v2122 = vadd.f32 %v1966, %v2056
      %v2123 = vadd.f32 %v1967, %v2059
      %v2124 = vadd.f32 %v1968, %v2061
      %v2125 = vadd.f32 %v1969, %v2064
      %v2126 = vadd.f32 %v1970, %v2066
      %v2127 = vadd.f32 %v1971, %v2069
      %v2128 = vadd.f32 %v1972, %v2071
      %v2129 = vadd.f32 %v1973, %v2074
      %v2130 = vadd.f32 %v1974, %v2076
      %v2131 = vadd.f32 %v1975, %v2079
      %v2132 = vadd.f32 %v1976, %v2081
      %v2133 = vadd.f32 %v1977, %v2084
      %v2134 = vadd.f32 %v1978, %v2086
      %v2135 = vadd.f32 %v1979, %v2089
      %v2136 = vadd.f32 %v1980, %v2091
      %v2137 = vadd.f32 %v1981, %v2094
      %v2138 = vadd.f32 %v1982, %v2096
      %v2139 = vadd.f32 %v1983, %v2099
      %v2140 = vadd.f32 %v1984, %v2101
      %v2141 = vadd.f32 %v1985, %v2104
      %v2142 = vadd.f32 %v1986, %v2106
      %v2143 = vadd.f32 %v1987, %v2109
      %v2144 = vadd.f32 %v1988, %v2111
      %v2146 = vrot.slane %v269, 5
      %v2147 = vrot.slane %v2146, 4
      %v2148 = vrot.slane %v270, 5
      %v2149 = vsel %vm1090, %v2147, %v2148
      %v2150 = vrot.slane %v2148, 4
      %v2151 = vrot.slane %v271, 5
      %v2152 = vsel %vm1090, %v2150, %v2151
      %s2153 = scalar_lea.vmem %s1, 16
      %v2154 = vld [vmem:[%s2153] sm:$0x3]
      %v2155 = vunpack.c.l.b16 %v2149
      %v2156 = vunpack.c.l.b16 %v2152
      %v2157 = vpack.c.b16 %v2156, %v2155
      %v2159 = vsel %vm710, %v2157, 0
      %v2162 = vsel %vm759, %v2154, 0
      %2164 = vmatpush.bf16.msra.mxu0 0
      %2165 = vmatpush.bf16.msra.mxu0 0
      %2166 = vmatpush.bf16.msra.mxu0 0
      %2167 = vmatpush.bf16.msra.mxu0 0
      %2168 = vmatpush.bf16.msra.mxu0 0
      %2169 = vmatpush.bf16.msra.mxu0 0
      %2170 = vmatpush.bf16.msra.mxu0 0
      %2171 = vmatpush.bf16.msra.mxu0 %v2162
      %2172 = vmatmul.bf16.gmra.mxu0 %v1260
      %v2173 = vpop.f32.mrf.mxu0
      %v2174 = vadd.f32 0.0, %v2173
      %v2175 = vpop.f32.mrf.mxu0
      %v2176 = vadd.f32 0.0, %v2175
      %2177 = vmatmul.bf16.gmra.mxu0 %v1263
      %v2178 = vpop.f32.mrf.mxu0
      %v2179 = vadd.f32 0.0, %v2178
      %v2180 = vpop.f32.mrf.mxu0
      %v2181 = vadd.f32 0.0, %v2180
      %2182 = vmatmul.bf16.gmra.mxu0 %v1266
      %v2183 = vpop.f32.mrf.mxu0
      %v2184 = vadd.f32 0.0, %v2183
      %v2185 = vpop.f32.mrf.mxu0
      %v2186 = vadd.f32 0.0, %v2185
      %2187 = vmatmul.bf16.gmra.mxu0 %v1269
      %v2188 = vpop.f32.mrf.mxu0
      %v2189 = vadd.f32 0.0, %v2188
      %v2190 = vpop.f32.mrf.mxu0
      %v2191 = vadd.f32 0.0, %v2190
      %2192 = vmatmul.bf16.gmra.mxu0 %v1272
      %v2193 = vpop.f32.mrf.mxu0
      %v2194 = vadd.f32 0.0, %v2193
      %v2195 = vpop.f32.mrf.mxu0
      %v2196 = vadd.f32 0.0, %v2195
      %2197 = vmatmul.bf16.gmra.mxu0 %v1275
      %v2198 = vpop.f32.mrf.mxu0
      %v2199 = vadd.f32 0.0, %v2198
      %v2200 = vpop.f32.mrf.mxu0
      %v2201 = vadd.f32 0.0, %v2200
      %2202 = vmatmul.bf16.gmra.mxu0 %v1278
      %v2203 = vpop.f32.mrf.mxu0
      %v2204 = vadd.f32 0.0, %v2203
      %v2205 = vpop.f32.mrf.mxu0
      %v2206 = vadd.f32 0.0, %v2205
      %2207 = vmatmul.bf16.gmra.mxu0 %v1281
      %v2208 = vpop.f32.mrf.mxu0
      %v2209 = vadd.f32 0.0, %v2208
      %v2210 = vpop.f32.mrf.mxu0
      %v2211 = vadd.f32 0.0, %v2210
      %2212 = vmatmul.bf16.gmra.mxu0 %v1284
      %v2213 = vpop.f32.mrf.mxu0
      %v2214 = vadd.f32 0.0, %v2213
      %v2215 = vpop.f32.mrf.mxu0
      %v2216 = vadd.f32 0.0, %v2215
      %2217 = vmatmul.bf16.gmra.mxu0 %v1287
      %v2218 = vpop.f32.mrf.mxu0
      %v2219 = vadd.f32 0.0, %v2218
      %v2220 = vpop.f32.mrf.mxu0
      %v2221 = vadd.f32 0.0, %v2220
      %2222 = vmatmul.bf16.gmra.mxu0 %v1290
      %v2223 = vpop.f32.mrf.mxu0
      %v2224 = vadd.f32 0.0, %v2223
      %v2225 = vpop.f32.mrf.mxu0
      %v2226 = vadd.f32 0.0, %v2225
      %2227 = vmatmul.bf16.gmra.mxu0 %v1293
      %v2228 = vpop.f32.mrf.mxu0
      %v2229 = vadd.f32 0.0, %v2228
      %v2230 = vpop.f32.mrf.mxu0
      %v2231 = vadd.f32 0.0, %v2230
      %2232 = vmatmul.bf16.gmra.mxu0 %v1296
      %v2233 = vpop.f32.mrf.mxu0
      %v2234 = vadd.f32 0.0, %v2233
      %v2235 = vpop.f32.mrf.mxu0
      %v2236 = vadd.f32 0.0, %v2235
      %2237 = vmatmul.bf16.gmra.mxu0 %v1299
      %v2238 = vpop.f32.mrf.mxu0
      %v2239 = vadd.f32 0.0, %v2238
      %v2240 = vpop.f32.mrf.mxu0
      %v2241 = vadd.f32 0.0, %v2240
      %2242 = vmatmul.bf16.gmra.mxu0 %v1729
      %v2243 = vpop.f32.mrf.mxu0
      %v2244 = vadd.f32 0.0, %v2243
      %v2245 = vpop.f32.mrf.mxu0
      %v2246 = vadd.f32 0.0, %v2245
      %2247 = vmatmul.bf16.gmra.mxu0 %v2159
      %v2248 = vpop.f32.mrf.mxu0
      %v2249 = vadd.f32 0.0, %v2248
      %v2250 = vpop.f32.mrf.mxu0
      %v2251 = vadd.f32 0.0, %v2250
      %2252 = vdwg.mxu0
      %v2253 = vadd.f32 %v2113, %v2174
      %v2254 = vadd.f32 %v2114, %v2176
      %v2255 = vadd.f32 %v2115, %v2179
      %v2256 = vadd.f32 %v2116, %v2181
      %v2257 = vadd.f32 %v2117, %v2184
      %v2258 = vadd.f32 %v2118, %v2186
      %v2259 = vadd.f32 %v2119, %v2189
      %v2260 = vadd.f32 %v2120, %v2191
      %v2261 = vadd.f32 %v2121, %v2194
      %v2262 = vadd.f32 %v2122, %v2196
      %v2263 = vadd.f32 %v2123, %v2199
      %v2264 = vadd.f32 %v2124, %v2201
      %v2265 = vadd.f32 %v2125, %v2204
      %v2266 = vadd.f32 %v2126, %v2206
      %v2267 = vadd.f32 %v2127, %v2209
      %v2268 = vadd.f32 %v2128, %v2211
      %v2269 = vadd.f32 %v2129, %v2214
      %v2270 = vadd.f32 %v2130, %v2216
      %v2271 = vadd.f32 %v2131, %v2219
      %v2272 = vadd.f32 %v2132, %v2221
      %v2273 = vadd.f32 %v2133, %v2224
      %v2274 = vadd.f32 %v2134, %v2226
      %v2275 = vadd.f32 %v2135, %v2229
      %v2276 = vadd.f32 %v2136, %v2231
      %v2277 = vadd.f32 %v2137, %v2234
      %v2278 = vadd.f32 %v2138, %v2236
      %v2279 = vadd.f32 %v2139, %v2239
      %v2280 = vadd.f32 %v2140, %v2241
      %v2281 = vadd.f32 %v2141, %v2244
      %v2282 = vadd.f32 %v2142, %v2246
      %v2283 = vadd.f32 %v2143, %v2249
      %v2284 = vadd.f32 %v2144, %v2251
      %vm2285 = vcmask 64512
      %v2286 = vsel %vm2285, %v2253, 0.0
      %v2287 = vsel %vm2285, %v2254, 0.0
      %v2288 = vadd.f32 %v2286, %v2287
      %v2289 = vsel %vm2285, %v2255, 0.0
      %v2290 = vadd.f32 %v2288, %v2289
      %v2291 = vsel %vm2285, %v2256, 0.0
      %v2292 = vadd.f32 %v2290, %v2291
      %v2293 = vsel %vm2285, %v2257, 0.0
      %v2294 = vadd.f32 %v2292, %v2293
      %v2295 = vsel %vm2285, %v2258, 0.0
      %v2296 = vadd.f32 %v2294, %v2295
      %v2297 = vsel %vm2285, %v2259, 0.0
      %v2298 = vadd.f32 %v2296, %v2297
      %v2299 = vsel %vm2285, %v2260, 0.0
      %v2300 = vadd.f32 %v2298, %v2299
      %v2301 = vsel %vm2285, %v2261, 0.0
      %v2302 = vadd.f32 %v2300, %v2301
      %v2303 = vsel %vm2285, %v2262, 0.0
      %v2304 = vadd.f32 %v2302, %v2303
      %v2305 = vsel %vm2285, %v2263, 0.0
      %v2306 = vadd.f32 %v2304, %v2305
      %v2307 = vsel %vm2285, %v2264, 0.0
      %v2308 = vadd.f32 %v2306, %v2307
      %v2309 = vsel %vm2285, %v2265, 0.0
      %v2310 = vadd.f32 %v2308, %v2309
      %v2311 = vsel %vm2285, %v2266, 0.0
      %v2312 = vadd.f32 %v2310, %v2311
      %v2313 = vsel %vm2285, %v2267, 0.0
      %v2314 = vadd.f32 %v2312, %v2313
      %v2315 = vsel %vm2285, %v2268, 0.0
      %v2316 = vadd.f32 %v2314, %v2315
      %v2317 = vsel %vm2285, %v2269, 0.0
      %v2318 = vadd.f32 %v2316, %v2317
      %v2319 = vsel %vm2285, %v2270, 0.0
      %v2320 = vadd.f32 %v2318, %v2319
      %v2321 = vsel %vm2285, %v2271, 0.0
      %v2322 = vadd.f32 %v2320, %v2321
      %v2323 = vsel %vm2285, %v2272, 0.0
      %v2324 = vadd.f32 %v2322, %v2323
      %v2325 = vsel %vm2285, %v2273, 0.0
      %v2326 = vadd.f32 %v2324, %v2325
      %v2327 = vsel %vm2285, %v2274, 0.0
      %v2328 = vadd.f32 %v2326, %v2327
      %v2329 = vsel %vm2285, %v2275, 0.0
      %v2330 = vadd.f32 %v2328, %v2329
      %v2331 = vsel %vm2285, %v2276, 0.0
      %v2332 = vadd.f32 %v2330, %v2331
      %v2333 = vsel %vm2285, %v2277, 0.0
      %v2334 = vadd.f32 %v2332, %v2333
      %v2335 = vsel %vm2285, %v2278, 0.0
      %v2336 = vadd.f32 %v2334, %v2335
      %v2337 = vsel %vm2285, %v2279, 0.0
      %v2338 = vadd.f32 %v2336, %v2337
      %v2339 = vsel %vm2285, %v2280, 0.0
      %v2340 = vadd.f32 %v2338, %v2339
      %v2341 = vsel %vm2285, %v2281, 0.0
      %v2342 = vadd.f32 %v2340, %v2341
      %v2343 = vsel %vm2285, %v2282, 0.0
      %v2344 = vadd.f32 %v2342, %v2343
      %v2345 = vsel %vm2285, %v2283, 0.0
      %v2346 = vadd.f32 %v2344, %v2345
      %v2347 = vsel %vm2285, %v2284, 0.0
      %v2348 = vadd.f32 %v2346, %v2347
      %v2349 = vrot.slane %v2348, 4
      %v2350 = vadd.f32 %v2348, %v2349
      %v2351 = vrot.slane %v2350, 2
      %v2352 = vadd.f32 %v2350, %v2351
      %v2353 = vrot.slane %v2352, 1
      %v2354 = vadd.f32 %v2352, %v2353
      %v2355 = vrcp.pop 256.0
      %v2356 = vmul.f32 256.0, %v2355
      %v2357 = vsub.f32 1.0, %v2356
      %v2358 = vmul.f32 %v2355, %v2357
      %v2359 = vadd.f32 %v2355, %v2358
      %vm2360 = vweird.f32 %v2355
      %v2361 = vsel %vm2360, %v2355, %v2359
      %v2362 = vmul.f32 %v2354, %v2361
      %v2363 = vsub.f32 %v2253, %v2362
      %v2364 = vsub.f32 %v2254, %v2362
      %v2365 = vsub.f32 %v2255, %v2362
      %v2366 = vsub.f32 %v2256, %v2362
      %v2367 = vsub.f32 %v2257, %v2362
      %v2368 = vsub.f32 %v2258, %v2362
      %v2369 = vsub.f32 %v2259, %v2362
      %v2370 = vsub.f32 %v2260, %v2362
      %v2371 = vsub.f32 %v2261, %v2362
      %v2372 = vsub.f32 %v2262, %v2362
      %v2373 = vsub.f32 %v2263, %v2362
      %v2374 = vsub.f32 %v2264, %v2362
      %v2375 = vsub.f32 %v2265, %v2362
      %v2376 = vsub.f32 %v2266, %v2362
      %v2377 = vsub.f32 %v2267, %v2362
      %v2378 = vsub.f32 %v2268, %v2362
      %v2379 = vsub.f32 %v2269, %v2362
      %v2380 = vsub.f32 %v2270, %v2362
      %v2381 = vsub.f32 %v2271, %v2362
      %v2382 = vsub.f32 %v2272, %v2362
      %v2383 = vsub.f32 %v2273, %v2362
      %v2384 = vsub.f32 %v2274, %v2362
      %v2385 = vsub.f32 %v2275, %v2362
      %v2386 = vsub.f32 %v2276, %v2362
      %v2387 = vsub.f32 %v2277, %v2362
      %v2388 = vsub.f32 %v2278, %v2362
      %v2389 = vsub.f32 %v2279, %v2362
      %v2390 = vsub.f32 %v2280, %v2362
      %v2391 = vsub.f32 %v2281, %v2362
      %v2392 = vsub.f32 %v2282, %v2362
      %v2393 = vsub.f32 %v2283, %v2362
      %v2394 = vsub.f32 %v2284, %v2362
      %v2395 = vmul.f32 %v2363, %v2363
      %v2396 = vmul.f32 %v2364, %v2364
      %v2397 = vmul.f32 %v2365, %v2365
      %v2398 = vmul.f32 %v2366, %v2366
      %v2399 = vmul.f32 %v2367, %v2367
      %v2400 = vmul.f32 %v2368, %v2368
      %v2401 = vmul.f32 %v2369, %v2369
      %v2402 = vmul.f32 %v2370, %v2370
      %v2403 = vmul.f32 %v2371, %v2371
      %v2404 = vmul.f32 %v2372, %v2372
      %v2405 = vmul.f32 %v2373, %v2373
      %v2406 = vmul.f32 %v2374, %v2374
      %v2407 = vmul.f32 %v2375, %v2375
      %v2408 = vmul.f32 %v2376, %v2376
      %v2409 = vmul.f32 %v2377, %v2377
      %v2410 = vmul.f32 %v2378, %v2378
      %v2411 = vmul.f32 %v2379, %v2379
      %v2412 = vmul.f32 %v2380, %v2380
      %v2413 = vmul.f32 %v2381, %v2381
      %v2414 = vmul.f32 %v2382, %v2382
      %v2415 = vmul.f32 %v2383, %v2383
      %v2416 = vmul.f32 %v2384, %v2384
      %v2417 = vmul.f32 %v2385, %v2385
      %v2418 = vmul.f32 %v2386, %v2386
      %v2419 = vmul.f32 %v2387, %v2387
      %v2420 = vmul.f32 %v2388, %v2388
      %v2421 = vmul.f32 %v2389, %v2389
      %v2422 = vmul.f32 %v2390, %v2390
      %v2423 = vmul.f32 %v2391, %v2391
      %v2424 = vmul.f32 %v2392, %v2392
      %v2425 = vmul.f32 %v2393, %v2393
      %v2426 = vmul.f32 %v2394, %v2394
      %v2427 = vsel %vm2285, %v2395, 0.0
      %v2428 = vsel %vm2285, %v2396, 0.0
      %v2429 = vadd.f32 %v2427, %v2428
      %v2430 = vsel %vm2285, %v2397, 0.0
      %v2431 = vadd.f32 %v2429, %v2430
      %v2432 = vsel %vm2285, %v2398, 0.0
      %v2433 = vadd.f32 %v2431, %v2432
      %v2434 = vsel %vm2285, %v2399, 0.0
      %v2435 = vadd.f32 %v2433, %v2434
      %v2436 = vsel %vm2285, %v2400, 0.0
      %v2437 = vadd.f32 %v2435, %v2436
      %v2438 = vsel %vm2285, %v2401, 0.0
      %v2439 = vadd.f32 %v2437, %v2438
      %v2440 = vsel %vm2285, %v2402, 0.0
      %v2441 = vadd.f32 %v2439, %v2440
      %v2442 = vsel %vm2285, %v2403, 0.0
      %v2443 = vadd.f32 %v2441, %v2442
      %v2444 = vsel %vm2285, %v2404, 0.0
      %v2445 = vadd.f32 %v2443, %v2444
      %v2446 = vsel %vm2285, %v2405, 0.0
      %v2447 = vadd.f32 %v2445, %v2446
      %v2448 = vsel %vm2285, %v2406, 0.0
      %v2449 = vadd.f32 %v2447, %v2448
      %v2450 = vsel %vm2285, %v2407, 0.0
      %v2451 = vadd.f32 %v2449, %v2450
      %v2452 = vsel %vm2285, %v2408, 0.0
      %v2453 = vadd.f32 %v2451, %v2452
      %v2454 = vsel %vm2285, %v2409, 0.0
      %v2455 = vadd.f32 %v2453, %v2454
      %v2456 = vsel %vm2285, %v2410, 0.0
      %v2457 = vadd.f32 %v2455, %v2456
      %v2458 = vsel %vm2285, %v2411, 0.0
      %v2459 = vadd.f32 %v2457, %v2458
      %v2460 = vsel %vm2285, %v2412, 0.0
      %v2461 = vadd.f32 %v2459, %v2460
      %v2462 = vsel %vm2285, %v2413, 0.0
      %v2463 = vadd.f32 %v2461, %v2462
      %v2464 = vsel %vm2285, %v2414, 0.0
      %v2465 = vadd.f32 %v2463, %v2464
      %v2466 = vsel %vm2285, %v2415, 0.0
      %v2467 = vadd.f32 %v2465, %v2466
      %v2468 = vsel %vm2285, %v2416, 0.0
      %v2469 = vadd.f32 %v2467, %v2468
      %v2470 = vsel %vm2285, %v2417, 0.0
      %v2471 = vadd.f32 %v2469, %v2470
      %v2472 = vsel %vm2285, %v2418, 0.0
      %v2473 = vadd.f32 %v2471, %v2472
      %v2474 = vsel %vm2285, %v2419, 0.0
      %v2475 = vadd.f32 %v2473, %v2474
      %v2476 = vsel %vm2285, %v2420, 0.0
      %v2477 = vadd.f32 %v2475, %v2476
      %v2478 = vsel %vm2285, %v2421, 0.0
      %v2479 = vadd.f32 %v2477, %v2478
      %v2480 = vsel %vm2285, %v2422, 0.0
      %v2481 = vadd.f32 %v2479, %v2480
      %v2482 = vsel %vm2285, %v2423, 0.0
      %v2483 = vadd.f32 %v2481, %v2482
      %v2484 = vsel %vm2285, %v2424, 0.0
      %v2485 = vadd.f32 %v2483, %v2484
      %v2486 = vsel %vm2285, %v2425, 0.0
      %v2487 = vadd.f32 %v2485, %v2486
      %v2488 = vsel %vm2285, %v2426, 0.0
      %v2489 = vadd.f32 %v2487, %v2488
      %v2490 = vrot.slane %v2489, 4
      %v2491 = vadd.f32 %v2489, %v2490
      %v2492 = vrot.slane %v2491, 2
      %v2493 = vadd.f32 %v2491, %v2492
      %v2494 = vrot.slane %v2493, 1
      %v2495 = vadd.f32 %v2493, %v2494
      %vm2496 = vcmask 1040384
      %v2497 = vsel %vm2496, %v2354, %v2495
      %vm2498 = vcmask 58368
      %2499 = vst.msk [vmem:[%s212] sm:$0x3] %vm2498, %v2497
      %2500 = vxpose.xlu0.b32.start [1/16] %v2253, 128
      %2501 = vxpose.xlu0.b32.cont [2/16] %v2254, 128
      %2502 = vxpose.xlu0.b32.cont [3/16] %v2255, 128
      %2503 = vxpose.xlu0.b32.cont [4/16] %v2256, 128
      %2504 = vxpose.xlu0.b32.cont [5/16] %v2257, 128
      %2505 = vxpose.xlu0.b32.cont [6/16] %v2258, 128
      %2506 = vxpose.xlu0.b32.cont [7/16] %v2259, 128
      %2507 = vxpose.xlu0.b32.cont [8/16] %v2260, 128
      %2508 = vxpose.xlu0.b32.cont [9/16] %v2261, 128
      %2509 = vxpose.xlu0.b32.cont [10/16] %v2262, 128
      %2510 = vxpose.xlu0.b32.cont [11/16] %v2263, 128
      %2511 = vxpose.xlu0.b32.cont [12/16] %v2264, 128
      %2512 = vxpose.xlu0.b32.cont [13/16] %v2265, 128
      %2513 = vxpose.xlu0.b32.cont [14/16] %v2266, 128
      %2514 = vxpose.xlu0.b32.cont [15/16] %v2267, 128
      %2515 = vxpose.xlu0.b32.end [16/16] %v2268, 128
      %v2516 = vpop.trf.xlu0
      %v2517 = vpop.trf.xlu0
      %v2518 = vpop.trf.xlu0
      %v2519 = vpop.trf.xlu0
      %v2520 = vpop.trf.xlu0
      %v2521 = vpop.trf.xlu0
      %v2522 = vpop.trf.xlu0
      %v2523 = vpop.trf.xlu0
      %v2524 = vpop.trf.xlu0
      %v2525 = vpop.trf.xlu0
      %v2526 = vpop.trf.xlu0
      %v2527 = vpop.trf.xlu0
      %v2528 = vpop.trf.xlu0
      %v2529 = vpop.trf.xlu0
      %v2530 = vpop.trf.xlu0
      %v2531 = vpop.trf.xlu0
      %2532 = vxpose.xlu0.b32.start [1/16] %v2269, 128
      %2533 = vxpose.xlu0.b32.cont [2/16] %v2270, 128
      %2534 = vxpose.xlu0.b32.cont [3/16] %v2271, 128
      %2535 = vxpose.xlu0.b32.cont [4/16] %v2272, 128
      %2536 = vxpose.xlu0.b32.cont [5/16] %v2273, 128
      %2537 = vxpose.xlu0.b32.cont [6/16] %v2274, 128
      %2538 = vxpose.xlu0.b32.cont [7/16] %v2275, 128
      %2539 = vxpose.xlu0.b32.cont [8/16] %v2276, 128
      %2540 = vxpose.xlu0.b32.cont [9/16] %v2277, 128
      %2541 = vxpose.xlu0.b32.cont [10/16] %v2278, 128
      %2542 = vxpose.xlu0.b32.cont [11/16] %v2279, 128
      %2543 = vxpose.xlu0.b32.cont [12/16] %v2280, 128
      %2544 = vxpose.xlu0.b32.cont [13/16] %v2281, 128
      %2545 = vxpose.xlu0.b32.cont [14/16] %v2282, 128
      %2546 = vxpose.xlu0.b32.cont [15/16] %v2283, 128
      %2547 = vxpose.xlu0.b32.end [16/16] %v2284, 128
      %v2548 = vpop.trf.xlu0
      %v2549 = vpop.trf.xlu0
      %v2550 = vpop.trf.xlu0
      %v2551 = vpop.trf.xlu0
      %v2552 = vpop.trf.xlu0
      %v2553 = vpop.trf.xlu0
      %v2554 = vpop.trf.xlu0
      %v2555 = vpop.trf.xlu0
      %v2556 = vpop.trf.xlu0
      %v2557 = vpop.trf.xlu0
      %v2558 = vpop.trf.xlu0
      %v2559 = vpop.trf.xlu0
      %v2560 = vpop.trf.xlu0
      %v2561 = vpop.trf.xlu0
      %v2562 = vpop.trf.xlu0
      %v2563 = vpop.trf.xlu0
      %v2564 = vpack.c.bf16 %v2548, %v2516
      %2565 = vst [vmem:[%s204] sm:$0xff] %v2564
      %s2566 = smul.u32 2, %s20
      %p2567 = scmp.lt.s32.totalorder %s19, 1
      %s2568 = scalar_select %p2567, %s19, 1
      %p2569 = scmp.lt.s32.totalorder %s2566, 1
      %s2570 = scalar_select %p2569, %s2566, 1
      %s2571 = smul.addr %s2568, 2
      %s2572 = sadd.s32 %s2570, %s2571
      %s2573 = smul.addr %s2572, 4
      %s2574 = scalar_lea.vmem %s2, %s2573
      %p2575 = scmp.lt.s32.totalorder %s19, 1
      %s2576 = scalar_select %p2575, %s19, 1
      %p2577 = scmp.lt.s32.totalorder %s20, 0
      %s2578 = scalar_select %p2577, %s20, 0
      %s2579 = sadd.s32 %s2578, %s2576
      %s2580 = smul.addr %s2579, 2
      %s2581 = scalar_lea.vmem %s3, %s2580
      // Predicated region
      $region29: #{conv_norm_relu.2} parent=27 // pred_check
        %p2582 = pneg %p94
      $region30: #{conv_norm_relu.2} parent=27 // pred_check_branch
        %2584 = sbr.rel (%p2582) target = $region32
      $region31: #{conv_norm_relu.2} parent=27 // pred_region
        %s2585 = smul.u32 2, %s20
      $region32: #{conv_norm_relu.2} parent=27 // pred_fallthru
        _
      // Predicated region
      $region33: #{conv_norm_relu.2} parent=27 // pred_check
        %p2586 = pneg %p122
      $region34: #{conv_norm_relu.2} parent=27 // pred_check_branch
        %2588 = sbr.rel (%p2586) target = $region36
      $region35: #{conv_norm_relu.2} parent=27 // pred_region
        _
      $region36: #{conv_norm_relu.2} parent=27 // pred_fallthru
        _
    $region28: #{conv_norm_relu.2} parent=5 // pred_fallthru
      _
    %p2589 = scmp.le.s32.totalorder 2, %s10
    // Predicated region
    $region37: #{conv_norm_relu.2} parent=5 // pred_check
      %p2590 = pneg %p2589
    $region38: #{conv_norm_relu.2} parent=5 // pred_check_branch
      %2592 = sbr.rel (%p2590) target = $region40
    $region39: #{conv_norm_relu.2} parent=5 // pred_region
      %s2593 = ssub.s32 %s10, 2
      // Predicated region
      $region41: #{conv_norm_relu.2} parent=39 // pred_check
        %p2594 = pneg %p100
      $region42: #{conv_norm_relu.2} parent=39 // pred_check_branch
        %2596 = sbr.rel (%p2594) target = $region44
      $region43: #{conv_norm_relu.2} parent=39 // pred_region
        %s2597 = smul.u32 2, %s22
        %p2598 = scmp.lt.s32.totalorder %s21, 1
        %s2599 = scalar_select %p2598, %s21, 1
        %p2600 = scmp.lt.s32.totalorder %s2597, 1
        %s2601 = scalar_select %p2600, %s2597, 1
        %s2602 = smul.addr %s2599, 2
        %s2603 = sadd.s32 %s2601, %s2602
        %s2604 = smul.addr %s2603, 4
        %s2605 = scalar_lea.vmem %s2, %s2604
      $region44: #{conv_norm_relu.2} parent=39 // pred_fallthru
        _
      // Predicated region
      $region45: #{conv_norm_relu.2} parent=39 // pred_check
        %p2606 = pneg %p128
      $region46: #{conv_norm_relu.2} parent=39 // pred_check_branch
        %2608 = sbr.rel (%p2606) target = $region48
      $region47: #{conv_norm_relu.2} parent=39 // pred_region
        %p2609 = scmp.lt.s32.totalorder %s21, 1
        %s2610 = scalar_select %p2609, %s21, 1
        %p2611 = scmp.lt.s32.totalorder %s22, 0
        %s2612 = scalar_select %p2611, %s22, 0
        %s2613 = sadd.s32 %s2612, %s2610
        %s2614 = smul.addr %s2613, 2
        %s2615 = scalar_lea.vmem %s3, %s2614
      $region48: #{conv_norm_relu.2} parent=39 // pred_fallthru
        _
    $region40: #{conv_norm_relu.2} parent=5 // pred_fallthru
      _
  $region6: #{conv_norm_relu.2} parent=0 // loop_footer
    %s14 = sadd.s32 1, %s10
  $region7: #{conv_norm_relu.2} parent=0 // loop_footer_branch
    %9 = sbr.rel target = $region3
  $region8: #{conv_norm_relu.2} parent=0 // loop_exit
    _

</llo_original>
